<compile_context>
chip_gen: v7x
topology: tpu7x:2x2x1
jax: 0.10.0
libtpu: 0.0.40
codegen_flags: <defaults>
</compile_context>

<pallas_src>
import functools

import jax
import jax.numpy as jnp
from jax.experimental import pallas as pl
from jax.experimental.pallas import tpu as pltpu

NEG_SLOPE_GAT = 0.2     # GATConv's internal leaky_relu on attention logits
NEG_SLOPE_ACT = 0.01    # F.leaky_relu default applied to the GAT output
MASK_VALUE = -1e30      # additive mask value for non-edges


def _leaky_relu(x, slope):
    return jnp.where(x > 0, x, slope * x)


# --------------------------------- kernels ---------------------------------- #

def _gat_aggregate(mask_i8, a_dst, a_src_t, xp_src, b_gat, *, heads, out_dim):
    """Dense masked multi-head GAT aggregation for one tile of destination rows.

    mask_i8 : [TR, N]  int8 adjacency (1 = edge src->dst or self loop)
    a_dst   : [TR, H]  destination attention logits for this row tile
    a_src_t : [H, N]   source attention logits for ALL nodes (lane layout)
    xp_src  : [N, H*D] GAT-transformed features for ALL source nodes
    b_gat   : [H, D]   per-head GATConv bias rows
    returns : [TR, H*D] leaky_relu(GAT output), heads concatenated.
    """
    # additive bias: mask=1 -> 0, mask=0 -> -1e30  (one FMA per element)
    bias = (mask_i8.astype(jnp.float32) - 1.0) * 1e30
    h1_parts = []
    for hd in range(heads):
        s = _leaky_relu(a_dst[:, hd:hd + 1] + a_src_t[hd:hd + 1, :], NEG_SLOPE_GAT) + bias
        s = s - jnp.max(s, axis=-1, keepdims=True)
        e = jnp.exp(s)                       # masked entries underflow to exactly 0
        att = e * pl.reciprocal(jnp.sum(e, axis=-1, keepdims=True), approx=True)
        head = jnp.dot(att, xp_src[:, hd * out_dim:(hd + 1) * out_dim],
                       preferred_element_type=jnp.float32)
        h1_parts.append(_leaky_relu(head + b_gat[hd:hd + 1, :], NEG_SLOPE_ACT))
    return jnp.concatenate(h1_parts, axis=-1)                  # [TR, H*D]


def _prologue_kernel(x_ref, w_xp_ref, b_xp_ref, a_mat_ref, w_outh_ref, b_outh_ref,
                     xp_ref, a_all_ref, out_h_ref):
    """Cell-0 source-side quantities; the preprocessor Linear is folded into the weights."""
    x = x_ref[...]
    xp = jnp.dot(x, w_xp_ref[...], preferred_element_type=jnp.float32) + b_xp_ref[...]
    xp_ref[...] = xp
    a_all_ref[...] = jnp.dot(xp, a_mat_ref[...], preferred_element_type=jnp.float32)
    out_h_ref[...] = (jnp.dot(x, w_outh_ref[...], preferred_element_type=jnp.float32)
                      + b_outh_ref[...])


def _cell_mid_kernel(mask_ref, a_dst_ref, out_h_ref,
                     xp_ref, a_src_t_ref, b_gat_ref, w_g_ref,
                     w_xp1_ref, b_xp1_ref, a_mat1_ref, w_outh1_ref, b_outh1_ref,
                     xp1_ref, a_all1_ref, out_h1_ref, *, heads, out_dim):
    """Cell 0 GAT + output linear for one dst-row tile, fused with cell 1's prologue."""
    h1 = _gat_aggregate(mask_ref[...], a_dst_ref[...], a_src_t_ref[...],
                        xp_ref[...], b_gat_ref[...], heads=heads, out_dim=out_dim)
    cell_out = out_h_ref[...] + jnp.dot(h1, w_g_ref[...],
                                        preferred_element_type=jnp.float32)
    # next cell's source-side quantities, computed while cell_out is still in VMEM
    xp1 = jnp.dot(cell_out, w_xp1_ref[...], preferred_element_type=jnp.float32) + b_xp1_ref[...]
    xp1_ref[...] = xp1
    a_all1_ref[...] = jnp.dot(xp1, a_mat1_ref[...], preferred_element_type=jnp.float32)
    out_h1_ref[...] = (jnp.dot(cell_out, w_outh1_ref[...], preferred_element_type=jnp.float32)
                       + b_outh1_ref[...])


def _cell_final_kernel(mask_ref, a_dst_ref, out_h_ref,
                       xp_ref, a_src_t_ref, b_gat_ref, w_g_ref,
                       w_clf_ref, b_clf_ref, logp_ref, *, heads, out_dim):
    """Cell 1 GAT + output linear + classifier + log_softmax for one dst-row tile."""
    h1 = _gat_aggregate(mask_ref[...], a_dst_ref[...], a_src_t_ref[...],
                        xp_ref[...], b_gat_ref[...], heads=heads, out_dim=out_dim)
    cell_out = out_h_ref[...] + jnp.dot(h1, w_g_ref[...],
                                        preferred_element_type=jnp.float32)
    logits = (jnp.dot(cell_out, w_clf_ref[...], preferred_element_type=jnp.float32)
              + b_clf_ref[...])              # padded class columns carry a -1e30 bias
    z = logits - jnp.max(logits, axis=-1, keepdims=True)
    logp_ref[...] = z - jnp.log(jnp.sum(jnp.exp(z), axis=-1, keepdims=True))


# ------------------------------ pallas wrapper ------------------------------- #

def _row_spec(tile_r, ncols):
    return pl.BlockSpec((tile_r, ncols), lambda i: (i, 0))


def _resident_spec(arr):
    # full array, constant index_map -> stays resident across the row grid
    return pl.BlockSpec(arr.shape, lambda i: (0, 0))


def nas_citeseer_forward(x, adj_mask, cell_params, clf_params, *, heads, out_dim,
                         num_class, tile_r=128, vmem_limit_bytes=64 * 1024 * 1024):
    assert len(cell_params) == 2
    n_real, feat = x.shape
    n_pad = tile_r * pl.cdiv(n_real, tile_r)
    if n_pad != n_real:
        pad = n_pad - n_real
        x = jnp.pad(x, ((0, pad), (0, 0)))
        adj_mask = jnp.pad(adj_mask, ((0, pad), (0, pad)))
        diag = jnp.arange(n_real, n_pad)
        adj_mask = adj_mask.at[diag, diag].set(jnp.int8(1))  # keep padded-row softmax defined

    grid = (n_pad // tile_r,)
    hd_dim = heads * out_dim
    cparams = pltpu.CompilerParams(dimension_semantics=("parallel",),
                                   vmem_limit_bytes=vmem_limit_bytes)
    c0, c1 = cell_params
    w_clf, b_clf = clf_params
    cpad = w_clf.shape[1]

    src_out_shape = (jax.ShapeDtypeStruct((n_pad, hd_dim), jnp.float32),
                     jax.ShapeDtypeStruct((n_pad, 2 * heads), jnp.float32),
                     jax.ShapeDtypeStruct((n_pad, out_dim), jnp.float32))
    src_out_specs = (_row_spec(tile_r, hd_dim), _row_spec(tile_r, 2 * heads),
                     _row_spec(tile_r, out_dim))

    # stage 1: cell0 source-side quantities (folded preprocessor Linear)
    xp0, a_all0, out_h0 = pl.pallas_call(
        _prologue_kernel,
        out_shape=src_out_shape,
        grid=grid,
        in_specs=[_row_spec(tile_r, feat),
                  _resident_spec(c0["w_xp"]), _resident_spec(c0["b_xp"]),
                  _resident_spec(c0["a_mat"]),
                  _resident_spec(c0["w_outh"]), _resident_spec(c0["b_outh"])],
        out_specs=src_out_specs,
        compiler_params=cparams,
    )(x, c0["w_xp"], c0["b_xp"], c0["a_mat"], c0["w_outh"], c0["b_outh"])

    a_src0_t = a_all0[:, :heads].T          # [H, N] one-shot relayout (tiny, plain JAX)
    a_dst0 = a_all0[:, heads:]

    # stage 2: cell0 GAT + output linear, fused with cell1's source-side prologue
    xp1, a_all1, out_h1 = pl.pallas_call(
        functools.partial(_cell_mid_kernel, heads=heads, out_dim=out_dim),
        out_shape=src_out_shape,
        grid=grid,
        in_specs=[_row_spec(tile_r, n_pad), _row_spec(tile_r, heads),
                  _row_spec(tile_r, out_dim),
                  _resident_spec(xp0), _resident_spec(a_src0_t),
                  _resident_spec(c0["b_gat"]), _resident_spec(c0["w_g"]),
                  _resident_spec(c1["w_xp"]), _resident_spec(c1["b_xp"]),
                  _resident_spec(c1["a_mat"]),
                  _resident_spec(c1["w_outh"]), _resident_spec(c1["b_outh"])],
        out_specs=src_out_specs,
        compiler_params=cparams,
    )(adj_mask, a_dst0, out_h0,
      xp0, a_src0_t, c0["b_gat"], c0["w_g"],
      c1["w_xp"], c1["b_xp"], c1["a_mat"], c1["w_outh"], c1["b_outh"])

    a_src1_t = a_all1[:, :heads].T
    a_dst1 = a_all1[:, heads:]

    # stage 3: cell1 GAT + output linear + classifier + log_softmax (lane-dense output)
    logp = pl.pallas_call(
        functools.partial(_cell_final_kernel, heads=heads, out_dim=out_dim),
        out_shape=jax.ShapeDtypeStruct((n_pad, cpad), jnp.float32),
        grid=grid,
        in_specs=[_row_spec(tile_r, n_pad), _row_spec(tile_r, heads),
                  _row_spec(tile_r, out_dim),
                  _resident_spec(xp1), _resident_spec(a_src1_t),
                  _resident_spec(c1["b_gat"]), _resident_spec(c1["w_g"]),
                  _resident_spec(w_clf), _resident_spec(b_clf)],
        out_specs=_row_spec(tile_r, cpad),
        compiler_params=cparams,
    )(adj_mask, a_dst1, out_h1, xp1, a_src1_t, c1["b_gat"], c1["w_g"], w_clf, b_clf)

    return logp[:n_real, :num_class]


# ---------------------------- host-side param prep --------------------------- #

def init_cell_params(key, cur_dim, hidden_dim, out_dim, heads, scale=0.1):
    """PyTorch-layout synthetic parameters for one NasCiteseerCell."""
    ks = jax.random.split(key, 8)
    w_pre = jax.random.normal(ks[0], (hidden_dim, cur_dim), jnp.float32) * scale
    b_pre = jax.random.normal(ks[1], (1, hidden_dim), jnp.float32) * scale
    w_gat = jax.random.normal(ks[2], (heads * out_dim, hidden_dim), jnp.float32) * scale
    att_src = jax.random.normal(ks[3], (heads, out_dim), jnp.float32) * scale
    att_dst = jax.random.normal(ks[4], (heads, out_dim), jnp.float32) * scale
    b_gat = jax.random.normal(ks[5], (1, heads * out_dim), jnp.float32) * scale
    w_lin = jax.random.normal(ks[6], (out_dim, hidden_dim + heads * out_dim),
                              jnp.float32) * scale
    b_lin = jax.random.normal(ks[7], (1, out_dim), jnp.float32) * scale
    return (w_pre, b_pre, w_gat, att_src, att_dst, b_gat, w_lin, b_lin)


def prepare_cell_params(params, *, heads, out_dim):
    """Kernel layout: fold preprocessor Linear into downstream linears (exact — no
    nonlinearity in between), pack per-head attention vectors into one block-diag
    matrix, pre-transpose everything."""
    w_pre, b_pre, w_gat, att_src, att_dst, b_gat, w_lin, b_lin = params
    hidden = w_pre.shape[0]

    w_pre_t = w_pre.T                        # [cur, hidden]
    w_gat_t = w_gat.T                        # [hidden, H*D]
    w_xp = w_pre_t @ w_gat_t                 # [cur, H*D]
    b_xp = b_pre @ w_gat_t                   # [1, H*D]

    a_mat = jnp.zeros((heads * out_dim, 2 * heads), jnp.float32)
    for hd in range(heads):
        a_mat = a_mat.at[hd * out_dim:(hd + 1) * out_dim, hd].set(att_src[hd])
        a_mat = a_mat.at[hd * out_dim:(hd + 1) * out_dim, heads + hd].set(att_dst[hd])

    w_lin_h_t = w_lin[:, :hidden].T          # [hidden, D]   (the cat([h, .]) block)
    w_outh = w_pre_t @ w_lin_h_t             # [cur, D]
    b_outh = b_pre @ w_lin_h_t + b_lin       # [1, D]
    w_g = w_lin[:, hidden:].T                # [H*D, D]      (the cat([., h1]) block)

    return dict(w_xp=w_xp, b_xp=b_xp, a_mat=a_mat,
                b_gat=b_gat.reshape(heads, out_dim),
                w_outh=w_outh, b_outh=b_outh, w_g=w_g)


def prepare_clf_params(w_clf, b_clf, pad_to=128):
    """Pre-transpose classifier weight and pad classes to 128 lanes (lane-dense store)."""
    num_class, out_dim = w_clf.shape
    w_t = jnp.zeros((out_dim, pad_to), jnp.float32).at[:, :num_class].set(w_clf.T)
    b = jnp.full((1, pad_to), MASK_VALUE, jnp.float32).at[:, :num_class].set(b_clf[0])
    return (w_t, b)


def build_adj_mask(edge_index, num_nodes):
    """int8 adjacency mask: 1 where edge (src -> dst) or self loop, 0 otherwise."""
    src, dst = edge_index[0], edge_index[1]
    adj = jnp.zeros((num_nodes, num_nodes), jnp.int8)
    adj = adj.at[dst, src].set(jnp.int8(1))
    diag = jnp.arange(num_nodes)
    adj = adj.at[diag, diag].set(jnp.int8(1))   # remove_self_loops + add_self_loops net effect
    return adj


# ------------------------------- f32 reference ------------------------------- #

def reference_forward(x, adj_mask, raw_cell_params, w_clf, b_clf, *, heads, out_dim):
    """Plain-JAX reference of the dense-masked GATConv formulation (PyTorch-layout params)."""
    mask = adj_mask.astype(jnp.float32)
    h_in = x
    for (w_pre, b_pre, w_gat, att_src, att_dst, b_gat, w_lin, b_lin) in raw_cell_params:
        h = h_in @ w_pre.T + b_pre
        xp = (h @ w_gat.T).reshape(-1, heads, out_dim)
        a_src = jnp.einsum("nhd,hd->nh", xp, att_src)
        a_dst = jnp.einsum("nhd,hd->nh", xp, att_dst)
        h1_heads = []
        for hd in range(heads):
            logits = jax.nn.leaky_relu(a_dst[:, hd][:, None] + a_src[:, hd][None, :],
                                       negative_slope=NEG_SLOPE_GAT)
            logits = jnp.where(mask > 0, logits, MASK_VALUE)
            att = jax.nn.softmax(logits, axis=-1)
            h1_heads.append(att @ xp[:, hd, :])
        h1 = jax.nn.leaky_relu(jnp.concatenate(h1_heads, axis=-1) + b_gat,
                               negative_slope=NEG_SLOPE_ACT)
        h_in = jnp.concatenate([h, h1], axis=-1) @ w_lin.T + b_lin
    logits = h_in @ w_clf.T + b_clf
    return jax.nn.log_softmax(logits, axis=-1)


# ----------------------------------- main ------------------------------------ #

if __name__ == "__main__":
    # Small synthetic problem consistent with NasCiteseer defaults (hidden=64, 2 cells).
    N = 256             # number of graph nodes (2 row tiles -> exercises the grid)
    FEATURES = 32       # features_num
    NUM_CLASS = 6
    HIDDEN = 64
    NUM_EDGES = 512     # << 1.4M  =>  multi_head = True  =>  heads = 6

    hidden_dim = max(HIDDEN, NUM_CLASS * 2)   # 64
    out_dim = hidden_dim
    heads = 6

    key = jax.random.PRNGKey(0)
    k_x, k_e, k_p0, k_p1, k_cw, k_cb = jax.random.split(key, 6)

    x = jax.random.normal(k_x, (N, FEATURES), jnp.float32)
    edge_index = jax.random.randint(k_e, (2, NUM_EDGES), 0, N, dtype=jnp.int32)
    adj_mask = build_adj_mask(edge_index, N)

    raw_cell_params = [
        init_cell_params(k_p0, FEATURES, hidden_dim, out_dim, heads),
        init_cell_params(k_p1, out_dim, hidden_dim, out_dim, heads),
    ]
    cell_kparams = [prepare_cell_params(p, heads=heads, out_dim=out_dim)
                    for p in raw_cell_params]

    w_clf = jax.random.normal(k_cw, (NUM_CLASS, out_dim), jnp.float32) * 0.1
    b_clf = jax.random.normal(k_cb, (1, NUM_CLASS), jnp.float32) * 0.1
    clf_kparams = prepare_clf_params(w_clf, b_clf)

    log_probs = nas_citeseer_forward(
        x, adj_mask, cell_kparams, clf_kparams,
        heads=heads, out_dim=out_dim, num_class=NUM_CLASS, tile_r=128)
    log_probs = jax.block_until_ready(log_probs)

    assert log_probs.shape == (N, NUM_CLASS)
    assert bool(jnp.all(jnp.isfinite(log_probs)))
    # rows of log_softmax must sum (in prob space) to ~1
    assert bool(jnp.allclose(jnp.sum(jnp.exp(log_probs), axis=-1), 1.0, atol=1e-4))

    ref = reference_forward(x, adj_mask, raw_cell_params, w_clf, b_clf,
                            heads=heads, out_dim=out_dim)
    max_err = float(jnp.max(jnp.abs(log_probs - ref)))
    assert bool(jnp.allclose(log_probs, ref, atol=1e-2, rtol=1e-2)), max_err

    print("KERNEL_OK")
</pallas_src>

<mosaic_0001>
module attributes {stable_mosaic.version = 11 : i64} {
  func.func @_prologue_kernel(%arg0: i32, %arg1: memref<128x32xf32, #tpu.memory_space<vmem>>, %arg2: memref<32x384xf32, #tpu.memory_space<vmem>>, %arg3: memref<1x384xf32, #tpu.memory_space<vmem>>, %arg4: memref<384x12xf32, #tpu.memory_space<vmem>>, %arg5: memref<32x64xf32, #tpu.memory_space<vmem>>, %arg6: memref<1x64xf32, #tpu.memory_space<vmem>>, %arg7: memref<128x384xf32, #tpu.memory_space<vmem>>, %arg8: memref<128x12xf32, #tpu.memory_space<vmem>>, %arg9: memref<128x64xf32, #tpu.memory_space<vmem>>) attributes {dimension_semantics = [#tpu.dimension_semantics<parallel>], iteration_bounds = array<i64: 2>, scalar_prefetch = 0 : i64, scratch_operands = 0 : i64, tpu.core_type = #tpu.core_type<tc>, window_params = [{transform_indices = @transform_0, window_bounds = array<i64: 128, 32>}, {pipeline_mode = #tpu.pipeline_mode<synchronous>, transform_indices = @transform_1, window_bounds = array<i64: 32, 384>}, {pipeline_mode = #tpu.pipeline_mode<synchronous>, transform_indices = @transform_2, window_bounds = array<i64: 1, 384>}, {pipeline_mode = #tpu.pipeline_mode<synchronous>, transform_indices = @transform_3, window_bounds = array<i64: 384, 12>}, {pipeline_mode = #tpu.pipeline_mode<synchronous>, transform_indices = @transform_4, window_bounds = array<i64: 32, 64>}, {pipeline_mode = #tpu.pipeline_mode<synchronous>, transform_indices = @transform_5, window_bounds = array<i64: 1, 64>}, {transform_indices = @transform_6, window_bounds = array<i64: 128, 384>}, {transform_indices = @transform_7, window_bounds = array<i64: 128, 12>}, {transform_indices = @transform_8, window_bounds = array<i64: 128, 64>}]} {
    %c0 = arith.constant 0 : index
    %c0_0 = arith.constant 0 : index
    %0 = vector.load %arg1[%c0, %c0_0] : memref<128x32xf32, #tpu.memory_space<vmem>>, vector<128x32xf32>
    %c0_1 = arith.constant 0 : index
    %c0_2 = arith.constant 0 : index
    %1 = vector.load %arg2[%c0_1, %c0_2] : memref<32x384xf32, #tpu.memory_space<vmem>>, vector<32x384xf32>
    %cst = arith.constant dense<0.000000e+00> : vector<128x384xf32>
    %2 = tpu.matmul %0, %1, %cst {dimension_numbers = #tpu.dot_dimension_numbers<[1], [0], [0], [1], [0, 0, 1, 1], [], []>} : vector<128x32xf32>, vector<32x384xf32>, vector<128x384xf32> -> vector<128x384xf32>
    %c0_3 = arith.constant 0 : index
    %c0_4 = arith.constant 0 : index
    %3 = vector.load %arg3[%c0_3, %c0_4] : memref<1x384xf32, #tpu.memory_space<vmem>>, vector<1x384xf32>
    %4 = vector.broadcast %3 : vector<1x384xf32> to vector<128x384xf32>
    %5 = arith.addf %2, %4 : vector<128x384xf32>
    %c0_5 = arith.constant 0 : index
    %c0_6 = arith.constant 0 : index
    %6 = vector.load %arg7[%c0_5, %c0_6] : memref<128x384xf32, #tpu.memory_space<vmem>>, vector<128x384xf32>
    tpu.vector_store %arg7[%c0_5, %c0_6], %5 {strides = array<i32>} : memref<128x384xf32, #tpu.memory_space<vmem>>, vector<128x384xf32>,
    %c0_7 = arith.constant 0 : index
    %c0_8 = arith.constant 0 : index
    %7 = vector.load %arg4[%c0_7, %c0_8] : memref<384x12xf32, #tpu.memory_space<vmem>>, vector<384x12xf32>
    %cst_9 = arith.constant dense<0.000000e+00> : vector<128x12xf32>
    %8 = tpu.matmul %5, %7, %cst_9 {dimension_numbers = #tpu.dot_dimension_numbers<[1], [0], [0], [1], [0, 0, 1, 1], [], []>} : vector<128x384xf32>, vector<384x12xf32>, vector<128x12xf32> -> vector<128x12xf32>
    %c0_10 = arith.constant 0 : index
    %c0_11 = arith.constant 0 : index
    %9 = vector.load %arg8[%c0_10, %c0_11] : memref<128x12xf32, #tpu.memory_space<vmem>>, vector<128x12xf32>
    tpu.vector_store %arg8[%c0_10, %c0_11], %8 {strides = array<i32>} : memref<128x12xf32, #tpu.memory_space<vmem>>, vector<128x12xf32>,
    %c0_12 = arith.constant 0 : index
    %c0_13 = arith.constant 0 : index
    %10 = vector.load %arg5[%c0_12, %c0_13] : memref<32x64xf32, #tpu.memory_space<vmem>>, vector<32x64xf32>
    %cst_14 = arith.constant dense<0.000000e+00> : vector<128x64xf32>
    %11 = tpu.matmul %0, %10, %cst_14 {dimension_numbers = #tpu.dot_dimension_numbers<[1], [0], [0], [1], [0, 0, 1, 1], [], []>} : vector<128x32xf32>, vector<32x64xf32>, vector<128x64xf32> -> vector<128x64xf32>
    %c0_15 = arith.constant 0 : index
    %c0_16 = arith.constant 0 : index
    %12 = vector.load %arg6[%c0_15, %c0_16] : memref<1x64xf32, #tpu.memory_space<vmem>>, vector<1x64xf32>
    %13 = vector.broadcast %12 : vector<1x64xf32> to vector<128x64xf32>
    %14 = arith.addf %11, %13 : vector<128x64xf32>
    %c0_17 = arith.constant 0 : index
    %c0_18 = arith.constant 0 : index
    %15 = vector.load %arg9[%c0_17, %c0_18] : memref<128x64xf32, #tpu.memory_space<vmem>>, vector<128x64xf32>
    tpu.vector_store %arg9[%c0_17, %c0_18], %14 {strides = array<i32>} : memref<128x64xf32, #tpu.memory_space<vmem>>, vector<128x64xf32>,
    return
  }
  func.func @transform_0(%arg0: i32) -> (i32, i32) {
    %c0_i32 = arith.constant 0 : i32
    %c0_i32_0 = arith.constant 0 : i32
    return %arg0, %c0_i32 : i32, i32
  }
  func.func @transform_1(%arg0: i32) -> (i32, i32) {
    %c0_i32 = arith.constant 0 : i32
    %c0_i32_0 = arith.constant 0 : i32
    %c0_i32_1 = arith.constant 0 : i32
    return %c0_i32, %c0_i32_0 : i32, i32
  }
  func.func @transform_2(%arg0: i32) -> (i32, i32) {
    %c0_i32 = arith.constant 0 : i32
    %c0_i32_0 = arith.constant 0 : i32
    %c0_i32_1 = arith.constant 0 : i32
    return %c0_i32, %c0_i32_0 : i32, i32
  }
  func.func @transform_3(%arg0: i32) -> (i32, i32) {
    %c0_i32 = arith.constant 0 : i32
    %c0_i32_0 = arith.constant 0 : i32
    %c0_i32_1 = arith.constant 0 : i32
    return %c0_i32, %c0_i32_0 : i32, i32
  }
  func.func @transform_4(%arg0: i32) -> (i32, i32) {
    %c0_i32 = arith.constant 0 : i32
    %c0_i32_0 = arith.constant 0 : i32
    %c0_i32_1 = arith.constant 0 : i32
    return %c0_i32, %c0_i32_0 : i32, i32
  }
  func.func @transform_5(%arg0: i32) -> (i32, i32) {
    %c0_i32 = arith.constant 0 : i32
    %c0_i32_0 = arith.constant 0 : i32
    %c0_i32_1 = arith.constant 0 : i32
    return %c0_i32, %c0_i32_0 : i32, i32
  }
  func.func @transform_6(%arg0: i32) -> (i32, i32) {
    %c0_i32 = arith.constant 0 : i32
    %c0_i32_0 = arith.constant 0 : i32
    return %arg0, %c0_i32 : i32, i32
  }
  func.func @transform_7(%arg0: i32) -> (i32, i32) {
    %c0_i32 = arith.constant 0 : i32
    %c0_i32_0 = arith.constant 0 : i32
    return %arg0, %c0_i32 : i32, i32
  }
  func.func @transform_8(%arg0: i32) -> (i32, i32) {
    %c0_i32 = arith.constant 0 : i32
    %c0_i32_0 = arith.constant 0 : i32
    return %arg0, %c0_i32 : i32, i32
  }
}

</mosaic_0001>

<llo_original>
// kernel: tpu_custom_call.1
$region0: #{tpu_custom_call.1}
  #allocation0 [shape = 'u32[]', space=smem, size = 0x4, offset = 0x4, fixed_abs, tag = 'smem constant byte address 0x4 - core index']
  #allocation1 [shape = 'u32[144,128]{1,0:T(1,128)}', space=vmem, size = 0x12000, scoped, tag = 'internal scratch']
  %s0 = inlined_call_operand.hbm [shape: f32[256,32], index: 0, kind: input, shape index: {}]
  %s1 = inlined_call_operand.hbm [shape: f32[32,384], index: 1, kind: input, shape index: {}]
  %s2 = inlined_call_operand.hbm [shape: f32[1,384], index: 2, kind: input, shape index: {}]
  %s3 = inlined_call_operand.hbm [shape: f32[384,12], index: 3, kind: input, shape index: {}]
  %s4 = inlined_call_operand.hbm [shape: f32[32,64], index: 4, kind: input, shape index: {}]
  %s5 = inlined_call_operand.hbm [shape: f32[1,64], index: 5, kind: input, shape index: {}]
  %s6 = inlined_call_operand.hbm [shape: f32[256,384], index: 6, kind: output, shape index: {0}]
  %s7 = inlined_call_operand.hbm [shape: f32[256,12], index: 7, kind: output, shape index: {1}]
  %s8 = inlined_call_operand.hbm [shape: f32[256,64], index: 8, kind: output, shape index: {2}]
  %9 = xla_tuple %s6, %s7, %s8
  %s10 = sld [smem:[#allocation0]]
  $region97: #{tpu_custom_call.1} parent=0
    _
  %s12 = ssub.s32 1, %s10
  %s13 = scalar_select 0, %s12, %s10
  $region1: #{tpu_custom_call.1} parent=0
    #allocation2 [shape = 'u8[131072]{0}', space=vmem, size = 0x20000, scoped, tag = 'input window, operand 0']
    #allocation3 [shape = 's32[2]{0}', space=sflag, size = 0x8, scoped, tag = 'scoped memory for tpu_custom_call.1']
    #allocation4 [shape = 's32[2]{0}', space=sflag, size = 0x8, scoped, tag = 'scoped memory for tpu_custom_call.1']
    #allocation5 [shape = 'u8[49152]{0}', space=vmem, size = 0xc000, scoped, tag = 'input window, operand 1, single buffered']
    #allocation6 [shape = 's32[1]{0}', space=sflag, size = 0x4, scoped, tag = 'scoped memory for tpu_custom_call.1']
    #allocation7 [shape = 'u8[1536]{0}', space=vmem, size = 0x800, scoped, tag = 'input window, operand 2, single buffered']
    #allocation8 [shape = 'u8[196608]{0}', space=vmem, size = 0x30000, scoped, tag = 'input window, operand 3, single buffered']
    #allocation9 [shape = 's32[1]{0}', space=sflag, size = 0x4, scoped, tag = 'scoped memory for tpu_custom_call.1']
    #allocation10 [shape = 'u8[16384]{0}', space=vmem, size = 0x4000, scoped, tag = 'input window, operand 4, single buffered']
    #allocation11 [shape = 'u8[512]{0}', space=vmem, size = 0x400, scoped, tag = 'input window, operand 5, single buffered']
    #allocation12 [shape = 's32[1]{0}', space=sflag, size = 0x4, scoped, tag = 'scoped memory for tpu_custom_call.1']
    #allocation13 [shape = 'u8[393216]{0}', space=vmem, size = 0x60000, scoped, tag = 'output window, operand 0']
    #allocation14 [shape = 'u8[131072]{0}', space=vmem, size = 0x20000, scoped, tag = 'output window, operand 1']
    #allocation15 [shape = 's32[2]{0}', space=sflag, size = 0x8, scoped, tag = 'scoped memory for tpu_custom_call.1']
    #allocation16 [shape = 'u8[131072]{0}', space=vmem, size = 0x20000, scoped, tag = 'output window, operand 2']
    %14 = vsyncpa [#allocation3], 0
    %s15 = scalar_lea.sflag [#allocation3], 1
    %16 = vsyncpa %s15, 0
    %17 = vsyncpa [#allocation6], 0
    %18 = vsyncpa [#allocation9], 0
    %19 = vsyncpa [#allocation12], 0
    %20 = vsyncpa [#allocation4], 0
    %s21 = scalar_lea.sflag [#allocation4], 1
    %22 = vsyncpa %s21, 0
    %23 = vsyncpa [#allocation15], 0
    %s24 = scalar_lea.sflag [#allocation15], 1
    %25 = vsyncpa %s24, 0
    loop: start=0, step=1, limit=4
    $region2: #{tpu_custom_call.1} parent=1 // loop_pre_header
      _
    $region3: #{tpu_custom_call.1} parent=1 // loop_header
      %s27 = sphi 0, %s31
      %p28 = scmp.ge.s32.totalorder %s27, 4
      %s37 = sphi 0, %s39
      %s40 = sphi 0, %s37
      %s41 = sphi 0, %s40
      %s57 = sphi 0, %s41
      %s61 = sphi 0, %s61
      %s63 = sphi 0, %s61
      %s64 = sphi 0, %s63
      %s78 = sphi 0, %s64
      %s82 = sphi 0, %s82
      %s84 = sphi 0, %s82
      %s85 = sphi 0, %s84
      %s99 = sphi 0, %s85
      %s103 = sphi 0, %s103
      %s105 = sphi 0, %s103
      %s106 = sphi 0, %s105
      %s120 = sphi 0, %s106
      %s124 = sphi 0, %s124
      %s126 = sphi 0, %s124
      %s127 = sphi 0, %s126
      %s141 = sphi 0, %s127
      %s145 = sphi 0, %s145
      %s147 = sphi 0, %s145
      %s148 = sphi 0, %s147
      %s162 = sphi 0, %s148
      %s168 = sphi 0, %s170
      %s171 = sphi 0, %s168
      %s172 = sphi 0, %s171
      %s188 = sphi 0, %s172
      %s194 = sphi 0, %s196
      %s197 = sphi 0, %s194
      %s198 = sphi 0, %s197
      %s214 = sphi 0, %s198
      %s220 = sphi 0, %s222
      %s223 = sphi 0, %s220
      %s224 = sphi 0, %s223
      %s240 = sphi 0, %s224
    $region4: #{tpu_custom_call.1} parent=1 // loop_header_branch
      %30 = sbr.rel (%p28) target = $region8
    $region5: #{tpu_custom_call.1} parent=1 // loop_body
      %s32 = ssub.s32 %s27, 1
      %s33 = ssub.s32 %s27, 2
      %s34 = sadd.s32 %s27, 1
      %s35 = ssub.s32 %s27, %s34
      %p36 = scmp.eq.s32.totalorder %s35, 0
      %s38 = sadd.s32 %s37, 1
      %s39 = scalar_select %p36, %s37, %s38
      %p42 = pneg %p36
      %p43 = scmp.eq.s32.totalorder %s27, 1
      %p44 = por %p42, %p43
      %p45 = scmp.ne.s32.totalorder %s37, %s40
      %p46 = scmp.eq.s32.totalorder %s27, 0
      %p47 = por %p45, %p46
      %p48 = scmp.ne.s32.totalorder %s37, %s40
      %p49 = scmp.eq.s32.totalorder %s32, 1
      %p50 = por %p48, %p49
      %p51 = scmp.ne.s32.totalorder %s40, %s41
      %p52 = scmp.eq.s32.totalorder %s32, 0
      %p53 = por %p51, %p52
      %p54 = scmp.ne.s32.totalorder %s40, %s41
      %p55 = scmp.eq.s32.totalorder %s33, 1
      %p56 = por %p54, %p55
      %p58 = scmp.ne.s32.totalorder %s41, %s57
      %p59 = scmp.eq.s32.totalorder %s33, 0
      %p60 = por %p58, %p59
      %s62 = sadd.s32 %s61, 1
      %p65 = scmp.eq.s32.totalorder %s27, 1
      %p66 = scmp.ne.s32.totalorder %s61, %s63
      %p67 = scmp.eq.s32.totalorder %s27, 0
      %p68 = por %p66, %p67
      %p69 = scmp.ne.s32.totalorder %s61, %s63
      %p70 = scmp.eq.s32.totalorder %s32, 1
      %p71 = por %p69, %p70
      %p72 = scmp.ne.s32.totalorder %s63, %s64
      %p73 = scmp.eq.s32.totalorder %s32, 0
      %p74 = por %p72, %p73
      %p75 = scmp.ne.s32.totalorder %s63, %s64
      %p76 = scmp.eq.s32.totalorder %s33, 1
      %p77 = por %p75, %p76
      %p79 = scmp.ne.s32.totalorder %s64, %s78
      %p80 = scmp.eq.s32.totalorder %s33, 0
      %p81 = por %p79, %p80
      %s83 = sadd.s32 %s82, 1
      %p86 = scmp.eq.s32.totalorder %s27, 1
      %p87 = scmp.ne.s32.totalorder %s82, %s84
      %p88 = scmp.eq.s32.totalorder %s27, 0
      %p89 = por %p87, %p88
      %p90 = scmp.ne.s32.totalorder %s82, %s84
      %p91 = scmp.eq.s32.totalorder %s32, 1
      %p92 = por %p90, %p91
      %p93 = scmp.ne.s32.totalorder %s84, %s85
      %p94 = scmp.eq.s32.totalorder %s32, 0
      %p95 = por %p93, %p94
      %p96 = scmp.ne.s32.totalorder %s84, %s85
      %p97 = scmp.eq.s32.totalorder %s33, 1
      %p98 = por %p96, %p97
      %p100 = scmp.ne.s32.totalorder %s85, %s99
      %p101 = scmp.eq.s32.totalorder %s33, 0
      %p102 = por %p100, %p101
      %s104 = sadd.s32 %s103, 1
      %p107 = scmp.eq.s32.totalorder %s27, 1
      %p108 = scmp.ne.s32.totalorder %s103, %s105
      %p109 = scmp.eq.s32.totalorder %s27, 0
      %p110 = por %p108, %p109
      %p111 = scmp.ne.s32.totalorder %s103, %s105
      %p112 = scmp.eq.s32.totalorder %s32, 1
      %p113 = por %p111, %p112
      %p114 = scmp.ne.s32.totalorder %s105, %s106
      %p115 = scmp.eq.s32.totalorder %s32, 0
      %p116 = por %p114, %p115
      %p117 = scmp.ne.s32.totalorder %s105, %s106
      %p118 = scmp.eq.s32.totalorder %s33, 1
      %p119 = por %p117, %p118
      %p121 = scmp.ne.s32.totalorder %s106, %s120
      %p122 = scmp.eq.s32.totalorder %s33, 0
      %p123 = por %p121, %p122
      %s125 = sadd.s32 %s124, 1
      %p128 = scmp.eq.s32.totalorder %s27, 1
      %p129 = scmp.ne.s32.totalorder %s124, %s126
      %p130 = scmp.eq.s32.totalorder %s27, 0
      %p131 = por %p129, %p130
      %p132 = scmp.ne.s32.totalorder %s124, %s126
      %p133 = scmp.eq.s32.totalorder %s32, 1
      %p134 = por %p132, %p133
      %p135 = scmp.ne.s32.totalorder %s126, %s127
      %p136 = scmp.eq.s32.totalorder %s32, 0
      %p137 = por %p135, %p136
      %p138 = scmp.ne.s32.totalorder %s126, %s127
      %p139 = scmp.eq.s32.totalorder %s33, 1
      %p140 = por %p138, %p139
      %p142 = scmp.ne.s32.totalorder %s127, %s141
      %p143 = scmp.eq.s32.totalorder %s33, 0
      %p144 = por %p142, %p143
      %s146 = sadd.s32 %s145, 1
      %p149 = scmp.eq.s32.totalorder %s27, 1
      %p150 = scmp.ne.s32.totalorder %s145, %s147
      %p151 = scmp.eq.s32.totalorder %s27, 0
      %p152 = por %p150, %p151
      %p153 = scmp.ne.s32.totalorder %s145, %s147
      %p154 = scmp.eq.s32.totalorder %s32, 1
      %p155 = por %p153, %p154
      %p156 = scmp.ne.s32.totalorder %s147, %s148
      %p157 = scmp.eq.s32.totalorder %s32, 0
      %p158 = por %p156, %p157
      %p159 = scmp.ne.s32.totalorder %s147, %s148
      %p160 = scmp.eq.s32.totalorder %s33, 1
      %p161 = por %p159, %p160
      %p163 = scmp.ne.s32.totalorder %s148, %s162
      %p164 = scmp.eq.s32.totalorder %s33, 0
      %p165 = por %p163, %p164
      %s166 = ssub.s32 %s27, %s34
      %p167 = scmp.eq.s32.totalorder %s166, 0
      %s169 = sadd.s32 %s168, 1
      %s170 = scalar_select %p167, %s168, %s169
      %p173 = pneg %p167
      %p174 = scmp.eq.s32.totalorder %s27, 1
      %p175 = por %p173, %p174
      %p176 = scmp.ne.s32.totalorder %s168, %s171
      %p177 = scmp.eq.s32.totalorder %s27, 0
      %p178 = por %p176, %p177
      %p179 = scmp.ne.s32.totalorder %s168, %s171
      %p180 = scmp.eq.s32.totalorder %s32, 1
      %p181 = por %p179, %p180
      %p182 = scmp.ne.s32.totalorder %s171, %s172
      %p183 = scmp.eq.s32.totalorder %s32, 0
      %p184 = por %p182, %p183
      %p185 = scmp.ne.s32.totalorder %s171, %s172
      %p186 = scmp.eq.s32.totalorder %s33, 1
      %p187 = por %p185, %p186
      %p189 = scmp.ne.s32.totalorder %s172, %s188
      %p190 = scmp.eq.s32.totalorder %s33, 0
      %p191 = por %p189, %p190
      %s192 = ssub.s32 %s27, %s34
      %p193 = scmp.eq.s32.totalorder %s192, 0
      %s195 = sadd.s32 %s194, 1
      %s196 = scalar_select %p193, %s194, %s195
      %p199 = pneg %p193
      %p200 = scmp.eq.s32.totalorder %s27, 1
      %p201 = por %p199, %p200
      %p202 = scmp.ne.s32.totalorder %s194, %s197
      %p203 = scmp.eq.s32.totalorder %s27, 0
      %p204 = por %p202, %p203
      %p205 = scmp.ne.s32.totalorder %s194, %s197
      %p206 = scmp.eq.s32.totalorder %s32, 1
      %p207 = por %p205, %p206
      %p208 = scmp.ne.s32.totalorder %s197, %s198
      %p209 = scmp.eq.s32.totalorder %s32, 0
      %p210 = por %p208, %p209
      %p211 = scmp.ne.s32.totalorder %s197, %s198
      %p212 = scmp.eq.s32.totalorder %s33, 1
      %p213 = por %p211, %p212
      %p215 = scmp.ne.s32.totalorder %s198, %s214
      %p216 = scmp.eq.s32.totalorder %s33, 0
      %p217 = por %p215, %p216
      %s218 = ssub.s32 %s27, %s34
      %p219 = scmp.eq.s32.totalorder %s218, 0
      %s221 = sadd.s32 %s220, 1
      %s222 = scalar_select %p219, %s220, %s221
      %p225 = pneg %p219
      %p226 = scmp.eq.s32.totalorder %s27, 1
      %p227 = por %p225, %p226
      %p228 = scmp.ne.s32.totalorder %s220, %s223
      %p229 = scmp.eq.s32.totalorder %s27, 0
      %p230 = por %p228, %p229
      %p231 = scmp.ne.s32.totalorder %s220, %s223
      %p232 = scmp.eq.s32.totalorder %s32, 1
      %p233 = por %p231, %p232
      %p234 = scmp.ne.s32.totalorder %s223, %s224
      %p235 = scmp.eq.s32.totalorder %s32, 0
      %p236 = por %p234, %p235
      %p237 = scmp.ne.s32.totalorder %s223, %s224
      %p238 = scmp.eq.s32.totalorder %s33, 1
      %p239 = por %p237, %p238
      %p241 = scmp.ne.s32.totalorder %s224, %s240
      %p242 = scmp.eq.s32.totalorder %s33, 0
      %p243 = por %p241, %p242
      %p244 = scmp.le.s32.totalorder 1, %s27
      %p245 = scmp.lt.s32.totalorder %s27, 3
      %p246 = pnand %p244, %p245
      %p247 = pneg %p246
      // Predicated region
      $region9: #{tpu_custom_call.1} parent=5 // pred_check
        _
      $region10: #{tpu_custom_call.1} parent=5 // pred_check_branch
        %249 = sbr.rel (%p246) target = $region12
      $region11: #{tpu_custom_call.1} parent=5 // pred_region
        %s250 = ssub.s32 %s27, 1
        // Predicated region
        $region13: #{tpu_custom_call.1} parent=11 // pred_check
          %p251 = pneg %p74
        $region14: #{tpu_custom_call.1} parent=11 // pred_check_branch
          %253 = sbr.rel (%p251) target = $region16
        $region15: #{tpu_custom_call.1} parent=11 // pred_region
          %s255 = ssub.s32 1536, 1536
          %256 = vsyncadd [#allocation6], %s255
          %s257 = sshll.u32 [#allocation5], 4
          %s258 = int_to_ptr.vmem [resolvable:$true] %s257
          %263 = dma.hbm_to_vmem [thread:$0]  %s1, 1536, %s258, [#allocation6], 384, 384, 24
        $region16: #{tpu_custom_call.1} parent=11 // pred_fallthru
          _
        // Predicated region
        $region17: #{tpu_custom_call.1} parent=11 // pred_check
          %p264 = pneg %p95
        $region18: #{tpu_custom_call.1} parent=11 // pred_check_branch
          %266 = sbr.rel (%p264) target = $region20
        $region19: #{tpu_custom_call.1} parent=11 // pred_region
          %s268 = ssub.s32 48, 48
          %269 = vsyncadd [#allocation6], %s268
          %s271 = sshll.u32 [#allocation7], 4
          %s272 = int_to_ptr.vmem [resolvable:$true] %s271
          %274 = dma.hbm_to_vmem [thread:$0]  %s2, 48, %s272, [#allocation6]
        $region20: #{tpu_custom_call.1} parent=11 // pred_fallthru
          _
        // Predicated region
        $region21: #{tpu_custom_call.1} parent=11 // pred_check
          %p275 = pneg %p116
        $region22: #{tpu_custom_call.1} parent=11 // pred_check_branch
          %277 = sbr.rel (%p275) target = $region24
        $region23: #{tpu_custom_call.1} parent=11 // pred_region
          %s279 = ssub.s32 6144, 6144
          %280 = vsyncadd [#allocation9], %s279
          %s281 = sshll.u32 [#allocation8], 4
          %s282 = int_to_ptr.vmem [resolvable:$true] %s281
          %287 = dma.hbm_to_vmem [thread:$0]  %s3, 6144, %s282, [#allocation9], 128, 128, 8
        $region24: #{tpu_custom_call.1} parent=11 // pred_fallthru
          _
        // Predicated region
        $region25: #{tpu_custom_call.1} parent=11 // pred_check
          %p288 = pneg %p137
        $region26: #{tpu_custom_call.1} parent=11 // pred_check_branch
          %290 = sbr.rel (%p288) target = $region28
        $region27: #{tpu_custom_call.1} parent=11 // pred_region
          %s292 = ssub.s32 512, 512
          %293 = vsyncadd [#allocation9], %s292
          %s294 = sshll.u32 [#allocation10], 4
          %s295 = int_to_ptr.vmem [resolvable:$true] %s294
          %300 = dma.hbm_to_vmem [thread:$0]  %s4, 512, %s295, [#allocation9], 128, 128, 8
        $region28: #{tpu_custom_call.1} parent=11 // pred_fallthru
          _
        // Predicated region
        $region29: #{tpu_custom_call.1} parent=11 // pred_check
          %p301 = pneg %p158
        $region30: #{tpu_custom_call.1} parent=11 // pred_check_branch
          %303 = sbr.rel (%p301) target = $region32
        $region31: #{tpu_custom_call.1} parent=11 // pred_region
          %s305 = ssub.s32 16, 16
          %306 = vsyncadd [#allocation12], %s305
          %s308 = sshll.u32 [#allocation11], 4
          %s309 = int_to_ptr.vmem [resolvable:$true] %s308
          %311 = dma.hbm_to_vmem [thread:$0]  %s5, 16, %s309, [#allocation12]
        $region32: #{tpu_custom_call.1} parent=11 // pred_fallthru
          _
      $region12: #{tpu_custom_call.1} parent=5 // pred_fallthru
        _
      %p312 = scmp.lt.s32.totalorder %s27, 2
      // Predicated region
      $region33: #{tpu_custom_call.1} parent=5 // pred_check
        %p313 = pneg %p312
      $region34: #{tpu_custom_call.1} parent=5 // pred_check_branch
        %315 = sbr.rel (%p313) target = $region36
      $region35: #{tpu_custom_call.1} parent=5 // pred_region
        // Predicated region
        $region37: #{tpu_custom_call.1} parent=35 // pred_check
          %p316 = pneg %p47
        $region38: #{tpu_custom_call.1} parent=35 // pred_check_branch
          %318 = sbr.rel (%p316) target = $region40
        $region39: #{tpu_custom_call.1} parent=35 // pred_region
          %s319 = sand.u32 %s37, 1
          %s320 = scalar_lea.sflag [#allocation3], %s319
          %s321 = sand.u32 %s37, 1
          %s322 = smul.addr %s321, 128
          %s323 = scalar_lea.vmem [#allocation2], %s322
          %s324 = smul.u32 16, %s27
          %s326 = ssub.s32 2048, 2048
          %327 = vsyncadd %s320, %s326
          %s328 = smul.addr %s324, 128
          %s329 = scalar_lea.hbm %s0, %s328
          %s330 = sshll.u32 %s323, 4
          %s331 = int_to_ptr.vmem [resolvable:$true] %s330
          %336 = dma.hbm_to_vmem [thread:$0]  %s329, 2048, %s331, %s320, 128, 128, 8
        $region40: #{tpu_custom_call.1} parent=35 // pred_fallthru
          _
      $region36: #{tpu_custom_call.1} parent=5 // pred_fallthru
        _
      %p337 = scmp.le.s32.totalorder 1, %s27
      %p338 = scmp.lt.s32.totalorder %s27, 3
      %p339 = pnand %p337, %p338
      %p340 = pneg %p339
      // Predicated region
      $region41: #{tpu_custom_call.1} parent=5 // pred_check
        _
      $region42: #{tpu_custom_call.1} parent=5 // pred_check_branch
        %342 = sbr.rel (%p339) target = $region44
      $region43: #{tpu_custom_call.1} parent=5 // pred_region
        %s343 = ssub.s32 %s27, 1
        %s344 = sand.u32 %s40, 1
        %s345 = scalar_lea.sflag [#allocation3], %s344
        %s346 = sand.u32 %s40, 1
        %s347 = smul.addr %s346, 128
        %s348 = scalar_lea.vmem [#allocation2], %s347
        // Predicated region
        $region45: #{tpu_custom_call.1} parent=43 // pred_check
          %p349 = pneg %p53
        $region46: #{tpu_custom_call.1} parent=43 // pred_check_branch
          %351 = sbr.rel (%p349) target = $region48
        $region47: #{tpu_custom_call.1} parent=43 // pred_region
          %352 = dma.done %s345, 2048
        $region48: #{tpu_custom_call.1} parent=43 // pred_fallthru
          _
        // Predicated region
        $region49: #{tpu_custom_call.1} parent=43 // pred_check
          %p353 = pneg %p74
        $region50: #{tpu_custom_call.1} parent=43 // pred_check_branch
          %355 = sbr.rel (%p353) target = $region52
        $region51: #{tpu_custom_call.1} parent=43 // pred_region
          %356 = dma.done [#allocation6], 1536
        $region52: #{tpu_custom_call.1} parent=43 // pred_fallthru
          _
        // Predicated region
        $region53: #{tpu_custom_call.1} parent=43 // pred_check
          %p357 = pneg %p95
        $region54: #{tpu_custom_call.1} parent=43 // pred_check_branch
          %359 = sbr.rel (%p357) target = $region56
        $region55: #{tpu_custom_call.1} parent=43 // pred_region
          %360 = dma.done [#allocation6], 48
        $region56: #{tpu_custom_call.1} parent=43 // pred_fallthru
          _
        // Predicated region
        $region57: #{tpu_custom_call.1} parent=43 // pred_check
          %p361 = pneg %p116
        $region58: #{tpu_custom_call.1} parent=43 // pred_check_branch
          %363 = sbr.rel (%p361) target = $region60
        $region59: #{tpu_custom_call.1} parent=43 // pred_region
          %364 = dma.done [#allocation9], 6144
        $region60: #{tpu_custom_call.1} parent=43 // pred_fallthru
          _
        // Predicated region
        $region61: #{tpu_custom_call.1} parent=43 // pred_check
          %p365 = pneg %p137
        $region62: #{tpu_custom_call.1} parent=43 // pred_check_branch
          %367 = sbr.rel (%p365) target = $region64
        $region63: #{tpu_custom_call.1} parent=43 // pred_region
          %368 = dma.done [#allocation9], 512
        $region64: #{tpu_custom_call.1} parent=43 // pred_fallthru
          _
        // Predicated region
        $region65: #{tpu_custom_call.1} parent=43 // pred_check
          %p369 = pneg %p158
        $region66: #{tpu_custom_call.1} parent=43 // pred_check_branch
          %371 = sbr.rel (%p369) target = $region68
        $region67: #{tpu_custom_call.1} parent=43 // pred_region
          %372 = dma.done [#allocation12], 16
        $region68: #{tpu_custom_call.1} parent=43 // pred_fallthru
          _
        %s373 = sand.u32 %s40, 1
        %s374 = scalar_lea.sflag [#allocation3], %s373
        %s375 = sand.u32 %s40, 1
        %s376 = smul.addr %s375, 128
        %s377 = scalar_lea.vmem [#allocation2], %s376
        %p378 = pneg %p53
        %p379 = pneg %p50
        %p380 = pneg %p74
        %p381 = pneg %p71
        %p382 = pneg %p95
        %p383 = pneg %p92
        %p384 = pneg %p116
        %p385 = pneg %p113
        %p386 = pneg %p137
        %p387 = pneg %p134
        %p388 = pneg %p158
        %p389 = pneg %p155
        %p390 = pneg %p184
        %p391 = pneg %p181
        %s392 = sand.u32 %s171, 1
        %s393 = scalar_lea.sflag [#allocation4], %s392
        %s394 = sand.u32 %s171, 1
        %s395 = smul.addr %s394, 384
        %s396 = scalar_lea.vmem [#allocation13], %s395
        %p397 = pneg %p210
        %p398 = pneg %p207
        %s399 = sand.u32 %s32, 1
        %s400 = scalar_lea.sflag [#allocation15], %s399
        %s401 = sand.u32 %s197, 1
        %s402 = smul.addr %s401, 128
        %s403 = scalar_lea.vmem [#allocation14], %s402
        %p404 = pneg %p236
        %p405 = pneg %p233
        %s406 = sand.u32 %s32, 1
        %s407 = scalar_lea.sflag [#allocation15], %s406
        %s408 = sand.u32 %s223, 1
        %s409 = smul.addr %s408, 128
        %s410 = scalar_lea.vmem [#allocation16], %s409
        %s411 = smul.u32 16, %s32
        %s412 = smul.u32 16, %s32
        %s413 = smul.u32 16, %s32
        %s414 = smul.u32 16, %s32
        %v415 = vld [vmem:[%s348] sm:$0xff]
        %v416 = vld [vmem:[%s348 + $0x8] sm:$0xff]
        %v417 = vld [vmem:[%s348 + $0x10] sm:$0xff]
        %v418 = vld [vmem:[%s348 + $0x18] sm:$0xff]
        %v419 = vld [vmem:[%s348 + $0x20] sm:$0xff]
        %v420 = vld [vmem:[%s348 + $0x28] sm:$0xff]
        %v421 = vld [vmem:[%s348 + $0x30] sm:$0xff]
        %v422 = vld [vmem:[%s348 + $0x38] sm:$0xff]
        %v423 = vld [vmem:[%s348 + $0x40] sm:$0xff]
        %v424 = vld [vmem:[%s348 + $0x48] sm:$0xff]
        %v425 = vld [vmem:[%s348 + $0x50] sm:$0xff]
        %v426 = vld [vmem:[%s348 + $0x58] sm:$0xff]
        %v427 = vld [vmem:[%s348 + $0x60] sm:$0xff]
        %v428 = vld [vmem:[%s348 + $0x68] sm:$0xff]
        %v429 = vld [vmem:[%s348 + $0x70] sm:$0xff]
        %v430 = vld [vmem:[%s348 + $0x78] sm:$0xff]
        %v431 = vld [vmem:[#allocation5] sm:$0xff]
        %v432 = vld [vmem:[#allocation5 + $0x8] sm:$0xff]
        %v433 = vld [vmem:[#allocation5 + $0x10] sm:$0xff]
        %v434 = vld [vmem:[#allocation5 + $0x18] sm:$0xff]
        %v435 = vld [vmem:[#allocation5 + $0x20] sm:$0xff]
        %v436 = vld [vmem:[#allocation5 + $0x28] sm:$0xff]
        %v437 = vld [vmem:[#allocation5 + $0x30] sm:$0xff]
        %v438 = vld [vmem:[#allocation5 + $0x38] sm:$0xff]
        %v439 = vld [vmem:[#allocation5 + $0x40] sm:$0xff]
        %v440 = vld [vmem:[#allocation5 + $0x48] sm:$0xff]
        %v441 = vld [vmem:[#allocation5 + $0x50] sm:$0xff]
        %v442 = vld [vmem:[#allocation5 + $0x58] sm:$0xff]
        %v443 = vld [vmem:[#allocation7] sm:$0x7]
        %v445 = vlaneseq
        %v446 = vshrl.u32 %v445, 7
        %v447 = vsub.s32 0, %v446
        %v448 = vrot.slane %v443, %v447
        %v449 = vlaneseq
        %v450 = vshrl.u32 %v449, 7
        %v451 = vsub.s32 1, %v450
        %v452 = vrot.slane %v443, %v451
        %v453 = vlaneseq
        %v454 = vshrl.u32 %v453, 7
        %v455 = vsub.s32 2, %v454
        %v456 = vrot.slane %v443, %v455
        %vm460 = vcmask 261120
        %v462 = vsel %vm460, %v415, 0
        %v465 = vsel %vm460, %v416, 0
        %v468 = vsel %vm460, %v417, 0
        %v471 = vsel %vm460, %v418, 0
        %v474 = vsel %vm460, %v419, 0
        %v477 = vsel %vm460, %v420, 0
        %v480 = vsel %vm460, %v421, 0
        %v483 = vsel %vm460, %v422, 0
        %v486 = vsel %vm460, %v423, 0
        %v489 = vsel %vm460, %v424, 0
        %v492 = vsel %vm460, %v425, 0
        %v495 = vsel %vm460, %v426, 0
        %v498 = vsel %vm460, %v427, 0
        %v501 = vsel %vm460, %v428, 0
        %v504 = vsel %vm460, %v429, 0
        %v507 = vsel %vm460, %v430, 0
        %509 = vmatprep.subr.mxu0 %v432
        %510 = vmatpush1.msra.mxu0 %v431
        %511 = vmatprep.subr.mxu0 %v435
        %512 = vmatpush1.msra.mxu0 %v434
        %513 = vmatprep.subr.mxu0 %v438
        %514 = vmatpush1.msra.mxu0 %v437
        %515 = vmatprep.subr.mxu0 %v441
        %516 = vmatpush1.msra.mxu0 %v440
        %517 = vmatprep.subr.mxu0 0.0
        %518 = vmatpush1.msra.mxu0 0.0
        %519 = vmatprep.subr.mxu0 0.0
        %520 = vmatpush1.msra.mxu0 0.0
        %521 = vmatprep.subr.mxu0 0.0
        %522 = vmatpush1.msra.mxu0 0.0
        %523 = vmatprep.subr.mxu0 0.0
        %524 = vmatpush1.msra.mxu0 0.0
        %525 = vmatprep.subr.mxu0 0.0
        %526 = vmatpush1.msra.mxu0 0.0
        %527 = vmatprep.subr.mxu0 0.0
        %528 = vmatpush1.msra.mxu0 0.0
        %529 = vmatprep.subr.mxu0 0.0
        %530 = vmatpush1.msra.mxu0 0.0
        %531 = vmatprep.subr.mxu0 0.0
        %532 = vmatpush1.msra.mxu0 0.0
        %533 = vmatprep.subr.mxu0 0.0
        %534 = vmatpush1.msra.mxu0 0.0
        %535 = vmatprep.subr.mxu0 0.0
        %536 = vmatpush1.msra.mxu0 0.0
        %537 = vmatprep.subr.mxu0 0.0
        %538 = vmatpush1.msra.mxu0 0.0
        %539 = vmatprep.subr.mxu0 0.0
        %540 = vmatpush1.msra.mxu0 0.0
        %541 = vmatprep.subr.mxu0 0.0
        %542 = vmatpush1.msra.mxu0 0.0
        %543 = vmatprep.subr.mxu0 0.0
        %544 = vmatpush1.msra.mxu0 0.0
        %545 = vmatprep.subr.mxu0 0.0
        %546 = vmatpush1.msra.mxu0 0.0
        %547 = vmatprep.subr.mxu0 0.0
        %548 = vmatpush1.msra.mxu0 0.0
        %549 = vmatprep.subr.mxu0 0.0
        %550 = vmatpush1.msra.mxu0 0.0
        %551 = vmatprep.subr.mxu0 0.0
        %552 = vmatpush1.msra.mxu0 0.0
        %553 = vmatprep.subr.mxu0 0.0
        %554 = vmatpush1.msra.mxu0 0.0
        %555 = vmatprep.subr.mxu0 0.0
        %556 = vmatpush1.msra.mxu0 0.0
        %557 = vmatprep.subr.mxu0 0.0
        %558 = vmatpush1.msra.mxu0 0.0
        %559 = vmatprep.subr.mxu0 0.0
        %560 = vmatpush1.msra.mxu0 0.0
        %561 = vmatprep.subr.mxu0 0.0
        %562 = vmatpush1.msra.mxu0 0.0
        %563 = vmatprep.subr.mxu0 0.0
        %564 = vmatpush1.msra.mxu0 0.0
        %565 = vmatprep.subr.mxu0 0.0
        %566 = vmatpush1.msra.mxu0 0.0
        %567 = vmatprep.subr.mxu0 0.0
        %568 = vmatpush1.msra.mxu0 0.0
        %569 = vmatprep.subr.mxu0 0.0
        %570 = vmatpush1.msra.mxu0 0.0
        %571 = vmatprep.subr.mxu0 0.0
        %572 = vmatpush1.msra.mxu0 0.0
        %573 = vmatprep.mubr.f32.mxu0 0.0
        %574 = vmatmul.mubr.f32.gmra.mrb[0].mxu0 %v462
        %v575 = vpop.f32.mrb[0].mxu0
        %v576 = vadd.f32 %v448, %v575
        %v577 = vpop.f32.mrb[0].mxu0
        %v578 = vadd.f32 %v452, %v577
        %579 = vmatprep.mubr.f32.mxu0 0.0
        %580 = vmatmul.mubr.f32.gmra.mrb[0].mxu0 %v465
        %v581 = vpop.f32.mrb[0].mxu0
        %v582 = vadd.f32 %v448, %v581
        %v583 = vpop.f32.mrb[0].mxu0
        %v584 = vadd.f32 %v452, %v583
        %585 = vmatprep.mubr.f32.mxu0 0.0
        %586 = vmatmul.mubr.f32.gmra.mrb[0].mxu0 %v468
        %v587 = vpop.f32.mrb[0].mxu0
        %v588 = vadd.f32 %v448, %v587
        %v589 = vpop.f32.mrb[0].mxu0
        %v590 = vadd.f32 %v452, %v589
        %591 = vmatprep.mubr.f32.mxu0 0.0
        %592 = vmatmul.mubr.f32.gmra.mrb[0].mxu0 %v471
        %v593 = vpop.f32.mrb[0].mxu0
        %v594 = vadd.f32 %v448, %v593
        %v595 = vpop.f32.mrb[0].mxu0
        %v596 = vadd.f32 %v452, %v595
        %597 = vmatprep.mubr.f32.mxu0 0.0
        %598 = vmatmul.mubr.f32.gmra.mrb[0].mxu0 %v474
        %v599 = vpop.f32.mrb[0].mxu0
        %v600 = vadd.f32 %v448, %v599
        %v601 = vpop.f32.mrb[0].mxu0
        %v602 = vadd.f32 %v452, %v601
        %603 = vmatprep.mubr.f32.mxu0 0.0
        %604 = vmatmul.mubr.f32.gmra.mrb[0].mxu0 %v477
        %v605 = vpop.f32.mrb[0].mxu0
        %v606 = vadd.f32 %v448, %v605
        %v607 = vpop.f32.mrb[0].mxu0
        %v608 = vadd.f32 %v452, %v607
        %609 = vmatprep.mubr.f32.mxu0 0.0
        %610 = vmatmul.mubr.f32.gmra.mrb[0].mxu0 %v480
        %v611 = vpop.f32.mrb[0].mxu0
        %v612 = vadd.f32 %v448, %v611
        %v613 = vpop.f32.mrb[0].mxu0
        %v614 = vadd.f32 %v452, %v613
        %615 = vmatprep.mubr.f32.mxu0 0.0
        %616 = vmatmul.mubr.f32.gmra.mrb[0].mxu0 %v483
        %v617 = vpop.f32.mrb[0].mxu0
        %v618 = vadd.f32 %v448, %v617
        %v619 = vpop.f32.mrb[0].mxu0
        %v620 = vadd.f32 %v452, %v619
        %621 = vmatprep.mubr.f32.mxu0 0.0
        %622 = vmatmul.mubr.f32.gmra.mrb[0].mxu0 %v486
        %v623 = vpop.f32.mrb[0].mxu0
        %v624 = vadd.f32 %v448, %v623
        %v625 = vpop.f32.mrb[0].mxu0
        %v626 = vadd.f32 %v452, %v625
        %627 = vmatprep.mubr.f32.mxu0 0.0
        %628 = vmatmul.mubr.f32.gmra.mrb[0].mxu0 %v489
        %v629 = vpop.f32.mrb[0].mxu0
        %v630 = vadd.f32 %v448, %v629
        %v631 = vpop.f32.mrb[0].mxu0
        %v632 = vadd.f32 %v452, %v631
        %633 = vmatprep.mubr.f32.mxu0 0.0
        %634 = vmatmul.mubr.f32.gmra.mrb[0].mxu0 %v492
        %v635 = vpop.f32.mrb[0].mxu0
        %v636 = vadd.f32 %v448, %v635
        %v637 = vpop.f32.mrb[0].mxu0
        %v638 = vadd.f32 %v452, %v637
        %639 = vmatprep.mubr.f32.mxu0 0.0
        %640 = vmatmul.mubr.f32.gmra.mrb[0].mxu0 %v495
        %v641 = vpop.f32.mrb[0].mxu0
        %v642 = vadd.f32 %v448, %v641
        %v643 = vpop.f32.mrb[0].mxu0
        %v644 = vadd.f32 %v452, %v643
        %645 = vmatprep.mubr.f32.mxu0 0.0
        %646 = vmatmul.mubr.f32.gmra.mrb[0].mxu0 %v498
        %v647 = vpop.f32.mrb[0].mxu0
        %v648 = vadd.f32 %v448, %v647
        %v649 = vpop.f32.mrb[0].mxu0
        %v650 = vadd.f32 %v452, %v649
        %651 = vmatprep.mubr.f32.mxu0 0.0
        %652 = vmatmul.mubr.f32.gmra.mrb[0].mxu0 %v501
        %v653 = vpop.f32.mrb[0].mxu0
        %v654 = vadd.f32 %v448, %v653
        %v655 = vpop.f32.mrb[0].mxu0
        %v656 = vadd.f32 %v452, %v655
        %657 = vmatprep.mubr.f32.mxu0 0.0
        %658 = vmatmul.mubr.f32.gmra.mrb[0].mxu0 %v504
        %v659 = vpop.f32.mrb[0].mxu0
        %v660 = vadd.f32 %v448, %v659
        %v661 = vpop.f32.mrb[0].mxu0
        %v662 = vadd.f32 %v452, %v661
        %663 = vmatprep.mubr.f32.mxu0 0.0
        %664 = vmatmul.mubr.f32.gmra.mrb[0].mxu0 %v507
        %v665 = vpop.f32.mrb[0].mxu0
        %v666 = vadd.f32 %v448, %v665
        %v667 = vpop.f32.mrb[0].mxu0
        %v668 = vadd.f32 %v452, %v667
        %669 = vdwg.mxu0
        %670 = vmatprep.subr.mxu0 0.0
        %671 = vmatpush1.msra.mxu0 %v433
        %672 = vmatprep.subr.mxu0 0.0
        %673 = vmatpush1.msra.mxu0 %v436
        %674 = vmatprep.subr.mxu0 0.0
        %675 = vmatpush1.msra.mxu0 %v439
        %676 = vmatprep.subr.mxu0 0.0
        %677 = vmatpush1.msra.mxu0 %v442
        %678 = vmatprep.subr.mxu0 0.0
        %679 = vmatpush1.msra.mxu0 0.0
        %680 = vmatprep.subr.mxu0 0.0
        %681 = vmatpush1.msra.mxu0 0.0
        %682 = vmatprep.subr.mxu0 0.0
        %683 = vmatpush1.msra.mxu0 0.0
        %684 = vmatprep.subr.mxu0 0.0
        %685 = vmatpush1.msra.mxu0 0.0
        %686 = vmatprep.subr.mxu0 0.0
        %687 = vmatpush1.msra.mxu0 0.0
        %688 = vmatprep.subr.mxu0 0.0
        %689 = vmatpush1.msra.mxu0 0.0
        %690 = vmatprep.subr.mxu0 0.0
        %691 = vmatpush1.msra.mxu0 0.0
        %692 = vmatprep.subr.mxu0 0.0
        %693 = vmatpush1.msra.mxu0 0.0
        %694 = vmatprep.subr.mxu0 0.0
        %695 = vmatpush1.msra.mxu0 0.0
        %696 = vmatprep.subr.mxu0 0.0
        %697 = vmatpush1.msra.mxu0 0.0
        %698 = vmatprep.subr.mxu0 0.0
        %699 = vmatpush1.msra.mxu0 0.0
        %700 = vmatprep.subr.mxu0 0.0
        %701 = vmatpush1.msra.mxu0 0.0
        %702 = vmatprep.subr.mxu0 0.0
        %703 = vmatpush1.msra.mxu0 0.0
        %704 = vmatprep.subr.mxu0 0.0
        %705 = vmatpush1.msra.mxu0 0.0
        %706 = vmatprep.subr.mxu0 0.0
        %707 = vmatpush1.msra.mxu0 0.0
        %708 = vmatprep.subr.mxu0 0.0
        %709 = vmatpush1.msra.mxu0 0.0
        %710 = vmatprep.subr.mxu0 0.0
        %711 = vmatpush1.msra.mxu0 0.0
        %712 = vmatprep.subr.mxu0 0.0
        %713 = vmatpush1.msra.mxu0 0.0
        %714 = vmatprep.subr.mxu0 0.0
        %715 = vmatpush1.msra.mxu0 0.0
        %716 = vmatprep.subr.mxu0 0.0
        %717 = vmatpush1.msra.mxu0 0.0
        %718 = vmatprep.subr.mxu0 0.0
        %719 = vmatpush1.msra.mxu0 0.0
        %720 = vmatprep.subr.mxu0 0.0
        %721 = vmatpush1.msra.mxu0 0.0
        %722 = vmatprep.subr.mxu0 0.0
        %723 = vmatpush1.msra.mxu0 0.0
        %724 = vmatprep.subr.mxu0 0.0
        %725 = vmatpush1.msra.mxu0 0.0
        %726 = vmatprep.subr.mxu0 0.0
        %727 = vmatpush1.msra.mxu0 0.0
        %728 = vmatprep.subr.mxu0 0.0
        %729 = vmatpush1.msra.mxu0 0.0
        %730 = vmatprep.subr.mxu0 0.0
        %731 = vmatpush1.msra.mxu0 0.0
        %732 = vmatprep.subr.mxu0 0.0
        %733 = vmatpush1.msra.mxu0 0.0
        %734 = vmatprep.mubr.f32.mxu0 0.0
        %735 = vmatmul.mubr.f32.gmra.mrb[0].mxu0 %v462
        %v736 = vpop.f32.mrb[0].mxu0
        %v737 = vadd.f32 %v456, %v736
        %v738 = vpop.f32.mrb[0].mxu0
        %739 = vmatprep.mubr.f32.mxu0 0.0
        %740 = vmatmul.mubr.f32.gmra.mrb[0].mxu0 %v465
        %v741 = vpop.f32.mrb[0].mxu0
        %v742 = vadd.f32 %v456, %v741
        %v743 = vpop.f32.mrb[0].mxu0
        %744 = vmatprep.mubr.f32.mxu0 0.0
        %745 = vmatmul.mubr.f32.gmra.mrb[0].mxu0 %v468
        %v746 = vpop.f32.mrb[0].mxu0
        %v747 = vadd.f32 %v456, %v746
        %v748 = vpop.f32.mrb[0].mxu0
        %749 = vmatprep.mubr.f32.mxu0 0.0
        %750 = vmatmul.mubr.f32.gmra.mrb[0].mxu0 %v471
        %v751 = vpop.f32.mrb[0].mxu0
        %v752 = vadd.f32 %v456, %v751
        %v753 = vpop.f32.mrb[0].mxu0
        %754 = vmatprep.mubr.f32.mxu0 0.0
        %755 = vmatmul.mubr.f32.gmra.mrb[0].mxu0 %v474
        %v756 = vpop.f32.mrb[0].mxu0
        %v757 = vadd.f32 %v456, %v756
        %v758 = vpop.f32.mrb[0].mxu0
        %759 = vmatprep.mubr.f32.mxu0 0.0
        %760 = vmatmul.mubr.f32.gmra.mrb[0].mxu0 %v477
        %v761 = vpop.f32.mrb[0].mxu0
        %v762 = vadd.f32 %v456, %v761
        %v763 = vpop.f32.mrb[0].mxu0
        %764 = vmatprep.mubr.f32.mxu0 0.0
        %765 = vmatmul.mubr.f32.gmra.mrb[0].mxu0 %v480
        %v766 = vpop.f32.mrb[0].mxu0
        %v767 = vadd.f32 %v456, %v766
        %v768 = vpop.f32.mrb[0].mxu0
        %769 = vmatprep.mubr.f32.mxu0 0.0
        %770 = vmatmul.mubr.f32.gmra.mrb[0].mxu0 %v483
        %v771 = vpop.f32.mrb[0].mxu0
        %v772 = vadd.f32 %v456, %v771
        %v773 = vpop.f32.mrb[0].mxu0
        %774 = vmatprep.mubr.f32.mxu0 0.0
        %775 = vmatmul.mubr.f32.gmra.mrb[0].mxu0 %v486
        %v776 = vpop.f32.mrb[0].mxu0
        %v777 = vadd.f32 %v456, %v776
        %v778 = vpop.f32.mrb[0].mxu0
        %779 = vmatprep.mubr.f32.mxu0 0.0
        %780 = vmatmul.mubr.f32.gmra.mrb[0].mxu0 %v489
        %v781 = vpop.f32.mrb[0].mxu0
        %v782 = vadd.f32 %v456, %v781
        %v783 = vpop.f32.mrb[0].mxu0
        %784 = vmatprep.mubr.f32.mxu0 0.0
        %785 = vmatmul.mubr.f32.gmra.mrb[0].mxu0 %v492
        %v786 = vpop.f32.mrb[0].mxu0
        %v787 = vadd.f32 %v456, %v786
        %v788 = vpop.f32.mrb[0].mxu0
        %789 = vmatprep.mubr.f32.mxu0 0.0
        %790 = vmatmul.mubr.f32.gmra.mrb[0].mxu0 %v495
        %v791 = vpop.f32.mrb[0].mxu0
        %v792 = vadd.f32 %v456, %v791
        %v793 = vpop.f32.mrb[0].mxu0
        %794 = vmatprep.mubr.f32.mxu0 0.0
        %795 = vmatmul.mubr.f32.gmra.mrb[0].mxu0 %v498
        %v796 = vpop.f32.mrb[0].mxu0
        %v797 = vadd.f32 %v456, %v796
        %v798 = vpop.f32.mrb[0].mxu0
        %799 = vmatprep.mubr.f32.mxu0 0.0
        %800 = vmatmul.mubr.f32.gmra.mrb[0].mxu0 %v501
        %v801 = vpop.f32.mrb[0].mxu0
        %v802 = vadd.f32 %v456, %v801
        %v803 = vpop.f32.mrb[0].mxu0
        %804 = vmatprep.mubr.f32.mxu0 0.0
        %805 = vmatmul.mubr.f32.gmra.mrb[0].mxu0 %v504
        %v806 = vpop.f32.mrb[0].mxu0
        %v807 = vadd.f32 %v456, %v806
        %v808 = vpop.f32.mrb[0].mxu0
        %809 = vmatprep.mubr.f32.mxu0 0.0
        %810 = vmatmul.mubr.f32.gmra.mrb[0].mxu0 %v507
        %v811 = vpop.f32.mrb[0].mxu0
        %v812 = vadd.f32 %v456, %v811
        %v813 = vpop.f32.mrb[0].mxu0
        %814 = vdwg.mxu0
        %815 = vst [vmem:[%s396] sm:$0xff] %v576
        %816 = vst [vmem:[%s396 + $0x8] sm:$0xff] %v578
        %817 = vst [vmem:[%s396 + $0x10] sm:$0xff] %v737
        %818 = vst [vmem:[%s396 + $0x18] sm:$0xff] %v582
        %819 = vst [vmem:[%s396 + $0x20] sm:$0xff] %v584
        %820 = vst [vmem:[%s396 + $0x28] sm:$0xff] %v742
        %821 = vst [vmem:[%s396 + $0x30] sm:$0xff] %v588
        %822 = vst [vmem:[%s396 + $0x38] sm:$0xff] %v590
        %823 = vst [vmem:[%s396 + $0x40] sm:$0xff] %v747
        %824 = vst [vmem:[%s396 + $0x48] sm:$0xff] %v594
        %825 = vst [vmem:[%s396 + $0x50] sm:$0xff] %v596
        %826 = vst [vmem:[%s396 + $0x58] sm:$0xff] %v752
        %827 = vst [vmem:[%s396 + $0x60] sm:$0xff] %v600
        %828 = vst [vmem:[%s396 + $0x68] sm:$0xff] %v602
        %829 = vst [vmem:[%s396 + $0x70] sm:$0xff] %v757
        %830 = vst [vmem:[%s396 + $0x78] sm:$0xff] %v606
        %831 = vst [vmem:[%s396 + $0x80] sm:$0xff] %v608
        %832 = vst [vmem:[%s396 + $0x88] sm:$0xff] %v762
        %833 = vst [vmem:[%s396 + $0x90] sm:$0xff] %v612
        %834 = vst [vmem:[%s396 + $0x98] sm:$0xff] %v614
        %835 = vst [vmem:[%s396 + $0xa0] sm:$0xff] %v767
        %836 = vst [vmem:[%s396 + $0xa8] sm:$0xff] %v618
        %837 = vst [vmem:[%s396 + $0xb0] sm:$0xff] %v620
        %838 = vst [vmem:[%s396 + $0xb8] sm:$0xff] %v772
        %839 = vst [vmem:[%s396 + $0xc0] sm:$0xff] %v624
        %840 = vst [vmem:[%s396 + $0xc8] sm:$0xff] %v626
        %841 = vst [vmem:[%s396 + $0xd0] sm:$0xff] %v777
        %842 = vst [vmem:[%s396 + $0xd8] sm:$0xff] %v630
        %843 = vst [vmem:[%s396 + $0xe0] sm:$0xff] %v632
        %844 = vst [vmem:[%s396 + $0xe8] sm:$0xff] %v782
        %845 = vst [vmem:[%s396 + $0xf0] sm:$0xff] %v636
        %846 = vst [vmem:[%s396 + $0xf8] sm:$0xff] %v638
        %847 = vst [vmem:[%s396 + $0x100] sm:$0xff] %v787
        %848 = vst [vmem:[%s396 + $0x108] sm:$0xff] %v642
        %849 = vst [vmem:[%s396 + $0x110] sm:$0xff] %v644
        %850 = vst [vmem:[%s396 + $0x118] sm:$0xff] %v792
        %851 = vst [vmem:[%s396 + $0x120] sm:$0xff] %v648
        %852 = vst [vmem:[%s396 + $0x128] sm:$0xff] %v650
        %853 = vst [vmem:[%s396 + $0x130] sm:$0xff] %v797
        %854 = vst [vmem:[%s396 + $0x138] sm:$0xff] %v654
        %855 = vst [vmem:[%s396 + $0x140] sm:$0xff] %v656
        %856 = vst [vmem:[%s396 + $0x148] sm:$0xff] %v802
        %857 = vst [vmem:[%s396 + $0x150] sm:$0xff] %v660
        %858 = vst [vmem:[%s396 + $0x158] sm:$0xff] %v662
        %859 = vst [vmem:[%s396 + $0x160] sm:$0xff] %v807
        %860 = vst [vmem:[%s396 + $0x168] sm:$0xff] %v666
        %861 = vst [vmem:[%s396 + $0x170] sm:$0xff] %v668
        %862 = vst [vmem:[%s396 + $0x178] sm:$0xff] %v812
        %v863 = vld [vmem:[#allocation8] sm:$0xff]
        %v864 = vld [vmem:[#allocation8 + $0x8] sm:$0xff]
        %v865 = vld [vmem:[#allocation8 + $0x10] sm:$0xff]
        %v866 = vld [vmem:[#allocation8 + $0x18] sm:$0xff]
        %v867 = vld [vmem:[#allocation8 + $0x20] sm:$0xff]
        %v868 = vld [vmem:[#allocation8 + $0x28] sm:$0xff]
        %v869 = vld [vmem:[#allocation8 + $0x30] sm:$0xff]
        %v870 = vld [vmem:[#allocation8 + $0x38] sm:$0xff]
        %v871 = vld [vmem:[#allocation8 + $0x40] sm:$0xff]
        %v872 = vld [vmem:[#allocation8 + $0x48] sm:$0xff]
        %v873 = vld [vmem:[#allocation8 + $0x50] sm:$0xff]
        %v874 = vld [vmem:[#allocation8 + $0x58] sm:$0xff]
        %v875 = vld [vmem:[#allocation8 + $0x60] sm:$0xff]
        %v876 = vld [vmem:[#allocation8 + $0x68] sm:$0xff]
        %v877 = vld [vmem:[#allocation8 + $0x70] sm:$0xff]
        %v878 = vld [vmem:[#allocation8 + $0x78] sm:$0xff]
        %v879 = vld [vmem:[#allocation8 + $0x80] sm:$0xff]
        %v880 = vld [vmem:[#allocation8 + $0x88] sm:$0xff]
        %v881 = vld [vmem:[#allocation8 + $0x90] sm:$0xff]
        %v882 = vld [vmem:[#allocation8 + $0x98] sm:$0xff]
        %v883 = vld [vmem:[#allocation8 + $0xa0] sm:$0xff]
        %v884 = vld [vmem:[#allocation8 + $0xa8] sm:$0xff]
        %v885 = vld [vmem:[#allocation8 + $0xb0] sm:$0xff]
        %v886 = vld [vmem:[#allocation8 + $0xb8] sm:$0xff]
        %v887 = vld [vmem:[#allocation8 + $0xc0] sm:$0xff]
        %v888 = vld [vmem:[#allocation8 + $0xc8] sm:$0xff]
        %v889 = vld [vmem:[#allocation8 + $0xd0] sm:$0xff]
        %v890 = vld [vmem:[#allocation8 + $0xd8] sm:$0xff]
        %v891 = vld [vmem:[#allocation8 + $0xe0] sm:$0xff]
        %v892 = vld [vmem:[#allocation8 + $0xe8] sm:$0xff]
        %v893 = vld [vmem:[#allocation8 + $0xf0] sm:$0xff]
        %v894 = vld [vmem:[#allocation8 + $0xf8] sm:$0xff]
        %v895 = vld [vmem:[#allocation8 + $0x100] sm:$0xff]
        %v896 = vld [vmem:[#allocation8 + $0x108] sm:$0xff]
        %v897 = vld [vmem:[#allocation8 + $0x110] sm:$0xff]
        %v898 = vld [vmem:[#allocation8 + $0x118] sm:$0xff]
        %v899 = vld [vmem:[#allocation8 + $0x120] sm:$0xff]
        %v900 = vld [vmem:[#allocation8 + $0x128] sm:$0xff]
        %v901 = vld [vmem:[#allocation8 + $0x130] sm:$0xff]
        %v902 = vld [vmem:[#allocation8 + $0x138] sm:$0xff]
        %v903 = vld [vmem:[#allocation8 + $0x140] sm:$0xff]
        %v904 = vld [vmem:[#allocation8 + $0x148] sm:$0xff]
        %v905 = vld [vmem:[#allocation8 + $0x150] sm:$0xff]
        %v906 = vld [vmem:[#allocation8 + $0x158] sm:$0xff]
        %v907 = vld [vmem:[#allocation8 + $0x160] sm:$0xff]
        %v908 = vld [vmem:[#allocation8 + $0x168] sm:$0xff]
        %v909 = vld [vmem:[#allocation8 + $0x170] sm:$0xff]
        %v910 = vld [vmem:[#allocation8 + $0x178] sm:$0xff]
        %911 = vmatprep.subr.mxu0 0.0
        %912 = vmatpush1.msra.mxu0 %v863
        %913 = vmatprep.subr.mxu0 0.0
        %914 = vmatpush1.msra.mxu0 %v864
        %915 = vmatprep.subr.mxu0 0.0
        %916 = vmatpush1.msra.mxu0 %v865
        %917 = vmatprep.subr.mxu0 0.0
        %918 = vmatpush1.msra.mxu0 %v866
        %919 = vmatprep.subr.mxu0 0.0
        %920 = vmatpush1.msra.mxu0 %v867
        %921 = vmatprep.subr.mxu0 0.0
        %922 = vmatpush1.msra.mxu0 %v868
        %923 = vmatprep.subr.mxu0 0.0
        %924 = vmatpush1.msra.mxu0 %v869
        %925 = vmatprep.subr.mxu0 0.0
        %926 = vmatpush1.msra.mxu0 %v870
        %927 = vmatprep.subr.mxu0 0.0
        %928 = vmatpush1.msra.mxu0 %v871
        %929 = vmatprep.subr.mxu0 0.0
        %930 = vmatpush1.msra.mxu0 %v872
        %931 = vmatprep.subr.mxu0 0.0
        %932 = vmatpush1.msra.mxu0 %v873
        %933 = vmatprep.subr.mxu0 0.0
        %934 = vmatpush1.msra.mxu0 %v874
        %935 = vmatprep.subr.mxu0 0.0
        %936 = vmatpush1.msra.mxu0 %v875
        %937 = vmatprep.subr.mxu0 0.0
        %938 = vmatpush1.msra.mxu0 %v876
        %939 = vmatprep.subr.mxu0 0.0
        %940 = vmatpush1.msra.mxu0 %v877
        %941 = vmatprep.subr.mxu0 0.0
        %942 = vmatpush1.msra.mxu0 %v878
        %943 = vmatprep.subr.mxu0 0.0
        %944 = vmatpush1.msra.mxu0 %v879
        %945 = vmatprep.subr.mxu0 0.0
        %946 = vmatpush1.msra.mxu0 %v880
        %947 = vmatprep.subr.mxu0 0.0
        %948 = vmatpush1.msra.mxu0 %v881
        %949 = vmatprep.subr.mxu0 0.0
        %950 = vmatpush1.msra.mxu0 %v882
        %951 = vmatprep.subr.mxu0 0.0
        %952 = vmatpush1.msra.mxu0 %v883
        %953 = vmatprep.subr.mxu0 0.0
        %954 = vmatpush1.msra.mxu0 %v884
        %955 = vmatprep.subr.mxu0 0.0
        %956 = vmatpush1.msra.mxu0 %v885
        %957 = vmatprep.subr.mxu0 0.0
        %958 = vmatpush1.msra.mxu0 %v886
        %959 = vmatprep.subr.mxu0 0.0
        %960 = vmatpush1.msra.mxu0 %v887
        %961 = vmatprep.subr.mxu0 0.0
        %962 = vmatpush1.msra.mxu0 %v888
        %963 = vmatprep.subr.mxu0 0.0
        %964 = vmatpush1.msra.mxu0 %v889
        %965 = vmatprep.subr.mxu0 0.0
        %966 = vmatpush1.msra.mxu0 %v890
        %967 = vmatprep.subr.mxu0 0.0
        %968 = vmatpush1.msra.mxu0 %v891
        %969 = vmatprep.subr.mxu0 0.0
        %970 = vmatpush1.msra.mxu0 %v892
        %971 = vmatprep.subr.mxu0 0.0
        %972 = vmatpush1.msra.mxu0 %v893
        %973 = vmatprep.subr.mxu0 0.0
        %974 = vmatpush1.msra.mxu0 %v894
        %975 = vmatprep.mubr.f32.mxu0 %v578
        %976 = vmatmul.mubr.f32.gmra.mrb[0].mxu0 %v576
        %v977 = vpop.f32.mrb[0].mxu0
        %v978 = vadd.f32 0.0, %v977
        %v979 = vpop.f32.mrb[0].mxu0
        %980 = vmatprep.mubr.f32.mxu0 %v584
        %981 = vmatmul.mubr.f32.gmra.mrb[0].mxu0 %v582
        %v982 = vpop.f32.mrb[0].mxu0
        %v983 = vadd.f32 0.0, %v982
        %v984 = vpop.f32.mrb[0].mxu0
        %985 = vmatprep.mubr.f32.mxu0 %v590
        %986 = vmatmul.mubr.f32.gmra.mrb[0].mxu0 %v588
        %v987 = vpop.f32.mrb[0].mxu0
        %v988 = vadd.f32 0.0, %v987
        %v989 = vpop.f32.mrb[0].mxu0
        %990 = vmatprep.mubr.f32.mxu0 %v596
        %991 = vmatmul.mubr.f32.gmra.mrb[0].mxu0 %v594
        %v992 = vpop.f32.mrb[0].mxu0
        %v993 = vadd.f32 0.0, %v992
        %v994 = vpop.f32.mrb[0].mxu0
        %995 = vmatprep.mubr.f32.mxu0 %v602
        %996 = vmatmul.mubr.f32.gmra.mrb[0].mxu0 %v600
        %v997 = vpop.f32.mrb[0].mxu0
        %v998 = vadd.f32 0.0, %v997
        %v999 = vpop.f32.mrb[0].mxu0
        %1000 = vmatprep.mubr.f32.mxu0 %v608
        %1001 = vmatmul.mubr.f32.gmra.mrb[0].mxu0 %v606
        %v1002 = vpop.f32.mrb[0].mxu0
        %v1003 = vadd.f32 0.0, %v1002
        %v1004 = vpop.f32.mrb[0].mxu0
        %1005 = vmatprep.mubr.f32.mxu0 %v614
        %1006 = vmatmul.mubr.f32.gmra.mrb[0].mxu0 %v612
        %v1007 = vpop.f32.mrb[0].mxu0
        %v1008 = vadd.f32 0.0, %v1007
        %v1009 = vpop.f32.mrb[0].mxu0
        %1010 = vmatprep.mubr.f32.mxu0 %v620
        %1011 = vmatmul.mubr.f32.gmra.mrb[0].mxu0 %v618
        %v1012 = vpop.f32.mrb[0].mxu0
        %v1013 = vadd.f32 0.0, %v1012
        %v1014 = vpop.f32.mrb[0].mxu0
        %1015 = vmatprep.mubr.f32.mxu0 %v626
        %1016 = vmatmul.mubr.f32.gmra.mrb[0].mxu0 %v624
        %v1017 = vpop.f32.mrb[0].mxu0
        %v1018 = vadd.f32 0.0, %v1017
        %v1019 = vpop.f32.mrb[0].mxu0
        %1020 = vmatprep.mubr.f32.mxu0 %v632
        %1021 = vmatmul.mubr.f32.gmra.mrb[0].mxu0 %v630
        %v1022 = vpop.f32.mrb[0].mxu0
        %v1023 = vadd.f32 0.0, %v1022
        %v1024 = vpop.f32.mrb[0].mxu0
        %1025 = vmatprep.mubr.f32.mxu0 %v638
        %1026 = vmatmul.mubr.f32.gmra.mrb[0].mxu0 %v636
        %v1027 = vpop.f32.mrb[0].mxu0
        %v1028 = vadd.f32 0.0, %v1027
        %v1029 = vpop.f32.mrb[0].mxu0
        %1030 = vmatprep.mubr.f32.mxu0 %v644
        %1031 = vmatmul.mubr.f32.gmra.mrb[0].mxu0 %v642
        %v1032 = vpop.f32.mrb[0].mxu0
        %v1033 = vadd.f32 0.0, %v1032
        %v1034 = vpop.f32.mrb[0].mxu0
        %1035 = vmatprep.mubr.f32.mxu0 %v650
        %1036 = vmatmul.mubr.f32.gmra.mrb[0].mxu0 %v648
        %v1037 = vpop.f32.mrb[0].mxu0
        %v1038 = vadd.f32 0.0, %v1037
        %v1039 = vpop.f32.mrb[0].mxu0
        %1040 = vmatprep.mubr.f32.mxu0 %v656
        %1041 = vmatmul.mubr.f32.gmra.mrb[0].mxu0 %v654
        %v1042 = vpop.f32.mrb[0].mxu0
        %v1043 = vadd.f32 0.0, %v1042
        %v1044 = vpop.f32.mrb[0].mxu0
        %1045 = vmatprep.mubr.f32.mxu0 %v662
        %1046 = vmatmul.mubr.f32.gmra.mrb[0].mxu0 %v660
        %v1047 = vpop.f32.mrb[0].mxu0
        %v1048 = vadd.f32 0.0, %v1047
        %v1049 = vpop.f32.mrb[0].mxu0
        %1050 = vmatprep.mubr.f32.mxu0 %v668
        %1051 = vmatmul.mubr.f32.gmra.mrb[0].mxu0 %v666
        %v1052 = vpop.f32.mrb[0].mxu0
        %v1053 = vadd.f32 0.0, %v1052
        %v1054 = vpop.f32.mrb[0].mxu0
        %1055 = vdwg.mxu0
        %1056 = vmatprep.subr.mxu0 0.0
        %1057 = vmatpush1.msra.mxu0 %v895
        %1058 = vmatprep.subr.mxu0 0.0
        %1059 = vmatpush1.msra.mxu0 %v896
        %1060 = vmatprep.subr.mxu0 0.0
        %1061 = vmatpush1.msra.mxu0 %v897
        %1062 = vmatprep.subr.mxu0 0.0
        %1063 = vmatpush1.msra.mxu0 %v898
        %1064 = vmatprep.subr.mxu0 0.0
        %1065 = vmatpush1.msra.mxu0 %v899
        %1066 = vmatprep.subr.mxu0 0.0
        %1067 = vmatpush1.msra.mxu0 %v900
        %1068 = vmatprep.subr.mxu0 0.0
        %1069 = vmatpush1.msra.mxu0 %v901
        %1070 = vmatprep.subr.mxu0 0.0
        %1071 = vmatpush1.msra.mxu0 %v902
        %1072 = vmatprep.subr.mxu0 0.0
        %1073 = vmatpush1.msra.mxu0 %v903
        %1074 = vmatprep.subr.mxu0 0.0
        %1075 = vmatpush1.msra.mxu0 %v904
        %1076 = vmatprep.subr.mxu0 0.0
        %1077 = vmatpush1.msra.mxu0 %v905
        %1078 = vmatprep.subr.mxu0 0.0
        %1079 = vmatpush1.msra.mxu0 %v906
        %1080 = vmatprep.subr.mxu0 0.0
        %1081 = vmatpush1.msra.mxu0 %v907
        %1082 = vmatprep.subr.mxu0 0.0
        %1083 = vmatpush1.msra.mxu0 %v908
        %1084 = vmatprep.subr.mxu0 0.0
        %1085 = vmatpush1.msra.mxu0 %v909
        %1086 = vmatprep.subr.mxu0 0.0
        %1087 = vmatpush1.msra.mxu0 %v910
        %1088 = vmatprep.subr.mxu0 0.0
        %1089 = vmatpush1.msra.mxu0 0.0
        %1090 = vmatprep.subr.mxu0 0.0
        %1091 = vmatpush1.msra.mxu0 0.0
        %1092 = vmatprep.subr.mxu0 0.0
        %1093 = vmatpush1.msra.mxu0 0.0
        %1094 = vmatprep.subr.mxu0 0.0
        %1095 = vmatpush1.msra.mxu0 0.0
        %1096 = vmatprep.subr.mxu0 0.0
        %1097 = vmatpush1.msra.mxu0 0.0
        %1098 = vmatprep.subr.mxu0 0.0
        %1099 = vmatpush1.msra.mxu0 0.0
        %1100 = vmatprep.subr.mxu0 0.0
        %1101 = vmatpush1.msra.mxu0 0.0
        %1102 = vmatprep.subr.mxu0 0.0
        %1103 = vmatpush1.msra.mxu0 0.0
        %1104 = vmatprep.subr.mxu0 0.0
        %1105 = vmatpush1.msra.mxu0 0.0
        %1106 = vmatprep.subr.mxu0 0.0
        %1107 = vmatpush1.msra.mxu0 0.0
        %1108 = vmatprep.subr.mxu0 0.0
        %1109 = vmatpush1.msra.mxu0 0.0
        %1110 = vmatprep.subr.mxu0 0.0
        %1111 = vmatpush1.msra.mxu0 0.0
        %1112 = vmatprep.subr.mxu0 0.0
        %1113 = vmatpush1.msra.mxu0 0.0
        %1114 = vmatprep.subr.mxu0 0.0
        %1115 = vmatpush1.msra.mxu0 0.0
        %1116 = vmatprep.subr.mxu0 0.0
        %1117 = vmatpush1.msra.mxu0 0.0
        %1118 = vmatprep.subr.mxu0 0.0
        %1119 = vmatpush1.msra.mxu0 0.0
        %1120 = vmatprep.mubr.f32.mxu0 0.0
        %1121 = vmatmul.mubr.f32.gmra.mrb[0].mxu0 %v737
        %v1122 = vpop.f32.mrb[0].mxu0
        %v1123 = vadd.f32 %v978, %v1122
        %v1124 = vpop.f32.mrb[0].mxu0
        %1125 = vmatprep.mubr.f32.mxu0 0.0
        %1126 = vmatmul.mubr.f32.gmra.mrb[0].mxu0 %v742
        %v1127 = vpop.f32.mrb[0].mxu0
        %v1128 = vadd.f32 %v983, %v1127
        %v1129 = vpop.f32.mrb[0].mxu0
        %1130 = vmatprep.mubr.f32.mxu0 0.0
        %1131 = vmatmul.mubr.f32.gmra.mrb[0].mxu0 %v747
        %v1132 = vpop.f32.mrb[0].mxu0
        %v1133 = vadd.f32 %v988, %v1132
        %v1134 = vpop.f32.mrb[0].mxu0
        %1135 = vmatprep.mubr.f32.mxu0 0.0
        %1136 = vmatmul.mubr.f32.gmra.mrb[0].mxu0 %v752
        %v1137 = vpop.f32.mrb[0].mxu0
        %v1138 = vadd.f32 %v993, %v1137
        %v1139 = vpop.f32.mrb[0].mxu0
        %1140 = vmatprep.mubr.f32.mxu0 0.0
        %1141 = vmatmul.mubr.f32.gmra.mrb[0].mxu0 %v757
        %v1142 = vpop.f32.mrb[0].mxu0
        %v1143 = vadd.f32 %v998, %v1142
        %v1144 = vpop.f32.mrb[0].mxu0
        %1145 = vmatprep.mubr.f32.mxu0 0.0
        %1146 = vmatmul.mubr.f32.gmra.mrb[0].mxu0 %v762
        %v1147 = vpop.f32.mrb[0].mxu0
        %v1148 = vadd.f32 %v1003, %v1147
        %v1149 = vpop.f32.mrb[0].mxu0
        %1150 = vmatprep.mubr.f32.mxu0 0.0
        %1151 = vmatmul.mubr.f32.gmra.mrb[0].mxu0 %v767
        %v1152 = vpop.f32.mrb[0].mxu0
        %v1153 = vadd.f32 %v1008, %v1152
        %v1154 = vpop.f32.mrb[0].mxu0
        %1155 = vmatprep.mubr.f32.mxu0 0.0
        %1156 = vmatmul.mubr.f32.gmra.mrb[0].mxu0 %v772
        %v1157 = vpop.f32.mrb[0].mxu0
        %v1158 = vadd.f32 %v1013, %v1157
        %v1159 = vpop.f32.mrb[0].mxu0
        %1160 = vmatprep.mubr.f32.mxu0 0.0
        %1161 = vmatmul.mubr.f32.gmra.mrb[0].mxu0 %v777
        %v1162 = vpop.f32.mrb[0].mxu0
        %v1163 = vadd.f32 %v1018, %v1162
        %v1164 = vpop.f32.mrb[0].mxu0
        %1165 = vmatprep.mubr.f32.mxu0 0.0
        %1166 = vmatmul.mubr.f32.gmra.mrb[0].mxu0 %v782
        %v1167 = vpop.f32.mrb[0].mxu0
        %v1168 = vadd.f32 %v1023, %v1167
        %v1169 = vpop.f32.mrb[0].mxu0
        %1170 = vmatprep.mubr.f32.mxu0 0.0
        %1171 = vmatmul.mubr.f32.gmra.mrb[0].mxu0 %v787
        %v1172 = vpop.f32.mrb[0].mxu0
        %v1173 = vadd.f32 %v1028, %v1172
        %v1174 = vpop.f32.mrb[0].mxu0
        %1175 = vmatprep.mubr.f32.mxu0 0.0
        %1176 = vmatmul.mubr.f32.gmra.mrb[0].mxu0 %v792
        %v1177 = vpop.f32.mrb[0].mxu0
        %v1178 = vadd.f32 %v1033, %v1177
        %v1179 = vpop.f32.mrb[0].mxu0
        %1180 = vmatprep.mubr.f32.mxu0 0.0
        %1181 = vmatmul.mubr.f32.gmra.mrb[0].mxu0 %v797
        %v1182 = vpop.f32.mrb[0].mxu0
        %v1183 = vadd.f32 %v1038, %v1182
        %v1184 = vpop.f32.mrb[0].mxu0
        %1185 = vmatprep.mubr.f32.mxu0 0.0
        %1186 = vmatmul.mubr.f32.gmra.mrb[0].mxu0 %v802
        %v1187 = vpop.f32.mrb[0].mxu0
        %v1188 = vadd.f32 %v1043, %v1187
        %v1189 = vpop.f32.mrb[0].mxu0
        %1190 = vmatprep.mubr.f32.mxu0 0.0
        %1191 = vmatmul.mubr.f32.gmra.mrb[0].mxu0 %v807
        %v1192 = vpop.f32.mrb[0].mxu0
        %v1193 = vadd.f32 %v1048, %v1192
        %v1194 = vpop.f32.mrb[0].mxu0
        %1195 = vmatprep.mubr.f32.mxu0 0.0
        %1196 = vmatmul.mubr.f32.gmra.mrb[0].mxu0 %v812
        %v1197 = vpop.f32.mrb[0].mxu0
        %v1198 = vadd.f32 %v1053, %v1197
        %v1199 = vpop.f32.mrb[0].mxu0
        %1200 = vdwg.mxu0
        %vm1201 = vcmask 97280
        %1202 = vst.msk [vmem:[%s403] sm:$0xff] %vm1201, %v1123
        %1203 = vst.msk [vmem:[%s403 + $0x8] sm:$0xff] %vm1201, %v1128
        %1204 = vst.msk [vmem:[%s403 + $0x10] sm:$0xff] %vm1201, %v1133
        %1205 = vst.msk [vmem:[%s403 + $0x18] sm:$0xff] %vm1201, %v1138
        %1206 = vst.msk [vmem:[%s403 + $0x20] sm:$0xff] %vm1201, %v1143
        %1207 = vst.msk [vmem:[%s403 + $0x28] sm:$0xff] %vm1201, %v1148
        %1208 = vst.msk [vmem:[%s403 + $0x30] sm:$0xff] %vm1201, %v1153
        %1209 = vst.msk [vmem:[%s403 + $0x38] sm:$0xff] %vm1201, %v1158
        %1210 = vst.msk [vmem:[%s403 + $0x40] sm:$0xff] %vm1201, %v1163
        %1211 = vst.msk [vmem:[%s403 + $0x48] sm:$0xff] %vm1201, %v1168
        %1212 = vst.msk [vmem:[%s403 + $0x50] sm:$0xff] %vm1201, %v1173
        %1213 = vst.msk [vmem:[%s403 + $0x58] sm:$0xff] %vm1201, %v1178
        %1214 = vst.msk [vmem:[%s403 + $0x60] sm:$0xff] %vm1201, %v1183
        %1215 = vst.msk [vmem:[%s403 + $0x68] sm:$0xff] %vm1201, %v1188
        %1216 = vst.msk [vmem:[%s403 + $0x70] sm:$0xff] %vm1201, %v1193
        %1217 = vst.msk [vmem:[%s403 + $0x78] sm:$0xff] %vm1201, %v1198
        %v1218 = vld [vmem:[#allocation10] sm:$0xff]
        %v1219 = vld [vmem:[#allocation10 + $0x8] sm:$0xff]
        %v1220 = vld [vmem:[#allocation10 + $0x10] sm:$0xff]
        %v1221 = vld [vmem:[#allocation10 + $0x18] sm:$0xff]
        %v1222 = vld [vmem:[#allocation11] sm:$0x1]
        %v1224 = vlaneseq
        %v1225 = vshrl.u32 %v1224, 7
        %v1226 = vsub.s32 0, %v1225
        %v1227 = vrot.slane %v1222, %v1226
        %1229 = vmatprep.subr.mxu0 0.0
        %1230 = vmatpush1.msra.mxu0 %v1218
        %1231 = vmatprep.subr.mxu0 0.0
        %1232 = vmatpush1.msra.mxu0 %v1219
        %1233 = vmatprep.subr.mxu0 0.0
        %1234 = vmatpush1.msra.mxu0 %v1220
        %1235 = vmatprep.subr.mxu0 0.0
        %1236 = vmatpush1.msra.mxu0 %v1221
        %1237 = vmatprep.subr.mxu0 0.0
        %1238 = vmatpush1.msra.mxu0 0.0
        %1239 = vmatprep.subr.mxu0 0.0
        %1240 = vmatpush1.msra.mxu0 0.0
        %1241 = vmatprep.subr.mxu0 0.0
        %1242 = vmatpush1.msra.mxu0 0.0
        %1243 = vmatprep.subr.mxu0 0.0
        %1244 = vmatpush1.msra.mxu0 0.0
        %1245 = vmatprep.subr.mxu0 0.0
        %1246 = vmatpush1.msra.mxu0 0.0
        %1247 = vmatprep.subr.mxu0 0.0
        %1248 = vmatpush1.msra.mxu0 0.0
        %1249 = vmatprep.subr.mxu0 0.0
        %1250 = vmatpush1.msra.mxu0 0.0
        %1251 = vmatprep.subr.mxu0 0.0
        %1252 = vmatpush1.msra.mxu0 0.0
        %1253 = vmatprep.subr.mxu0 0.0
        %1254 = vmatpush1.msra.mxu0 0.0
        %1255 = vmatprep.subr.mxu0 0.0
        %1256 = vmatpush1.msra.mxu0 0.0
        %1257 = vmatprep.subr.mxu0 0.0
        %1258 = vmatpush1.msra.mxu0 0.0
        %1259 = vmatprep.subr.mxu0 0.0
        %1260 = vmatpush1.msra.mxu0 0.0
        %1261 = vmatprep.subr.mxu0 0.0
        %1262 = vmatpush1.msra.mxu0 0.0
        %1263 = vmatprep.subr.mxu0 0.0
        %1264 = vmatpush1.msra.mxu0 0.0
        %1265 = vmatprep.subr.mxu0 0.0
        %1266 = vmatpush1.msra.mxu0 0.0
        %1267 = vmatprep.subr.mxu0 0.0
        %1268 = vmatpush1.msra.mxu0 0.0
        %1269 = vmatprep.subr.mxu0 0.0
        %1270 = vmatpush1.msra.mxu0 0.0
        %1271 = vmatprep.subr.mxu0 0.0
        %1272 = vmatpush1.msra.mxu0 0.0
        %1273 = vmatprep.subr.mxu0 0.0
        %1274 = vmatpush1.msra.mxu0 0.0
        %1275 = vmatprep.subr.mxu0 0.0
        %1276 = vmatpush1.msra.mxu0 0.0
        %1277 = vmatprep.subr.mxu0 0.0
        %1278 = vmatpush1.msra.mxu0 0.0
        %1279 = vmatprep.subr.mxu0 0.0
        %1280 = vmatpush1.msra.mxu0 0.0
        %1281 = vmatprep.subr.mxu0 0.0
        %1282 = vmatpush1.msra.mxu0 0.0
        %1283 = vmatprep.subr.mxu0 0.0
        %1284 = vmatpush1.msra.mxu0 0.0
        %1285 = vmatprep.subr.mxu0 0.0
        %1286 = vmatpush1.msra.mxu0 0.0
        %1287 = vmatprep.subr.mxu0 0.0
        %1288 = vmatpush1.msra.mxu0 0.0
        %1289 = vmatprep.subr.mxu0 0.0
        %1290 = vmatpush1.msra.mxu0 0.0
        %1291 = vmatprep.subr.mxu0 0.0
        %1292 = vmatpush1.msra.mxu0 0.0
        %1293 = vmatprep.mubr.f32.mxu0 0.0
        %1294 = vmatmul.mubr.f32.gmra.mrb[0].mxu0 %v462
        %v1295 = vpop.f32.mrb[0].mxu0
        %v1296 = vadd.f32 %v1227, %v1295
        %v1297 = vpop.f32.mrb[0].mxu0
        %1298 = vmatprep.mubr.f32.mxu0 0.0
        %1299 = vmatmul.mubr.f32.gmra.mrb[0].mxu0 %v465
        %v1300 = vpop.f32.mrb[0].mxu0
        %v1301 = vadd.f32 %v1227, %v1300
        %v1302 = vpop.f32.mrb[0].mxu0
        %1303 = vmatprep.mubr.f32.mxu0 0.0
        %1304 = vmatmul.mubr.f32.gmra.mrb[0].mxu0 %v468
        %v1305 = vpop.f32.mrb[0].mxu0
        %v1306 = vadd.f32 %v1227, %v1305
        %v1307 = vpop.f32.mrb[0].mxu0
        %1308 = vmatprep.mubr.f32.mxu0 0.0
        %1309 = vmatmul.mubr.f32.gmra.mrb[0].mxu0 %v471
        %v1310 = vpop.f32.mrb[0].mxu0
        %v1311 = vadd.f32 %v1227, %v1310
        %v1312 = vpop.f32.mrb[0].mxu0
        %1313 = vmatprep.mubr.f32.mxu0 0.0
        %1314 = vmatmul.mubr.f32.gmra.mrb[0].mxu0 %v474
        %v1315 = vpop.f32.mrb[0].mxu0
        %v1316 = vadd.f32 %v1227, %v1315
        %v1317 = vpop.f32.mrb[0].mxu0
        %1318 = vmatprep.mubr.f32.mxu0 0.0
        %1319 = vmatmul.mubr.f32.gmra.mrb[0].mxu0 %v477
        %v1320 = vpop.f32.mrb[0].mxu0
        %v1321 = vadd.f32 %v1227, %v1320
        %v1322 = vpop.f32.mrb[0].mxu0
        %1323 = vmatprep.mubr.f32.mxu0 0.0
        %1324 = vmatmul.mubr.f32.gmra.mrb[0].mxu0 %v480
        %v1325 = vpop.f32.mrb[0].mxu0
        %v1326 = vadd.f32 %v1227, %v1325
        %v1327 = vpop.f32.mrb[0].mxu0
        %1328 = vmatprep.mubr.f32.mxu0 0.0
        %1329 = vmatmul.mubr.f32.gmra.mrb[0].mxu0 %v483
        %v1330 = vpop.f32.mrb[0].mxu0
        %v1331 = vadd.f32 %v1227, %v1330
        %v1332 = vpop.f32.mrb[0].mxu0
        %1333 = vmatprep.mubr.f32.mxu0 0.0
        %1334 = vmatmul.mubr.f32.gmra.mrb[0].mxu0 %v486
        %v1335 = vpop.f32.mrb[0].mxu0
        %v1336 = vadd.f32 %v1227, %v1335
        %v1337 = vpop.f32.mrb[0].mxu0
        %1338 = vmatprep.mubr.f32.mxu0 0.0
        %1339 = vmatmul.mubr.f32.gmra.mrb[0].mxu0 %v489
        %v1340 = vpop.f32.mrb[0].mxu0
        %v1341 = vadd.f32 %v1227, %v1340
        %v1342 = vpop.f32.mrb[0].mxu0
        %1343 = vmatprep.mubr.f32.mxu0 0.0
        %1344 = vmatmul.mubr.f32.gmra.mrb[0].mxu0 %v492
        %v1345 = vpop.f32.mrb[0].mxu0
        %v1346 = vadd.f32 %v1227, %v1345
        %v1347 = vpop.f32.mrb[0].mxu0
        %1348 = vmatprep.mubr.f32.mxu0 0.0
        %1349 = vmatmul.mubr.f32.gmra.mrb[0].mxu0 %v495
        %v1350 = vpop.f32.mrb[0].mxu0
        %v1351 = vadd.f32 %v1227, %v1350
        %v1352 = vpop.f32.mrb[0].mxu0
        %1353 = vmatprep.mubr.f32.mxu0 0.0
        %1354 = vmatmul.mubr.f32.gmra.mrb[0].mxu0 %v498
        %v1355 = vpop.f32.mrb[0].mxu0
        %v1356 = vadd.f32 %v1227, %v1355
        %v1357 = vpop.f32.mrb[0].mxu0
        %1358 = vmatprep.mubr.f32.mxu0 0.0
        %1359 = vmatmul.mubr.f32.gmra.mrb[0].mxu0 %v501
        %v1360 = vpop.f32.mrb[0].mxu0
        %v1361 = vadd.f32 %v1227, %v1360
        %v1362 = vpop.f32.mrb[0].mxu0
        %1363 = vmatprep.mubr.f32.mxu0 0.0
        %1364 = vmatmul.mubr.f32.gmra.mrb[0].mxu0 %v504
        %v1365 = vpop.f32.mrb[0].mxu0
        %v1366 = vadd.f32 %v1227, %v1365
        %v1367 = vpop.f32.mrb[0].mxu0
        %1368 = vmatprep.mubr.f32.mxu0 0.0
        %1369 = vmatmul.mubr.f32.gmra.mrb[0].mxu0 %v507
        %v1370 = vpop.f32.mrb[0].mxu0
        %v1371 = vadd.f32 %v1227, %v1370
        %v1372 = vpop.f32.mrb[0].mxu0
        %1373 = vdwg.mxu0
        %vm1374 = vcmask 523264
        %1375 = vst.msk [vmem:[%s410] sm:$0xff] %vm1374, %v1296
        %1376 = vst.msk [vmem:[%s410 + $0x8] sm:$0xff] %vm1374, %v1301
        %1377 = vst.msk [vmem:[%s410 + $0x10] sm:$0xff] %vm1374, %v1306
        %1378 = vst.msk [vmem:[%s410 + $0x18] sm:$0xff] %vm1374, %v1311
        %1379 = vst.msk [vmem:[%s410 + $0x20] sm:$0xff] %vm1374, %v1316
        %1380 = vst.msk [vmem:[%s410 + $0x28] sm:$0xff] %vm1374, %v1321
        %1381 = vst.msk [vmem:[%s410 + $0x30] sm:$0xff] %vm1374, %v1326
        %1382 = vst.msk [vmem:[%s410 + $0x38] sm:$0xff] %vm1374, %v1331
        %1383 = vst.msk [vmem:[%s410 + $0x40] sm:$0xff] %vm1374, %v1336
        %1384 = vst.msk [vmem:[%s410 + $0x48] sm:$0xff] %vm1374, %v1341
        %1385 = vst.msk [vmem:[%s410 + $0x50] sm:$0xff] %vm1374, %v1346
        %1386 = vst.msk [vmem:[%s410 + $0x58] sm:$0xff] %vm1374, %v1351
        %1387 = vst.msk [vmem:[%s410 + $0x60] sm:$0xff] %vm1374, %v1356
        %1388 = vst.msk [vmem:[%s410 + $0x68] sm:$0xff] %vm1374, %v1361
        %1389 = vst.msk [vmem:[%s410 + $0x70] sm:$0xff] %vm1374, %v1366
        %1390 = vst.msk [vmem:[%s410 + $0x78] sm:$0xff] %vm1374, %v1371
        %s1391 = sand.u32 %s171, 1
        %s1392 = scalar_lea.sflag [#allocation4], %s1391
        %s1393 = sand.u32 %s171, 1
        %s1394 = smul.addr %s1393, 384
        %s1395 = scalar_lea.vmem [#allocation13], %s1394
        %s1396 = sand.u32 %s32, 1
        %s1397 = scalar_lea.sflag [#allocation15], %s1396
        %s1398 = sand.u32 %s197, 1
        %s1399 = smul.addr %s1398, 128
        %s1400 = scalar_lea.vmem [#allocation14], %s1399
        %s1401 = sand.u32 %s32, 1
        %s1402 = scalar_lea.sflag [#allocation15], %s1401
        %s1403 = sand.u32 %s223, 1
        %s1404 = smul.addr %s1403, 128
        %s1405 = scalar_lea.vmem [#allocation16], %s1404
        // Predicated region
        $region69: #{tpu_custom_call.1} parent=43 // pred_check
          %p1406 = pneg %p181
        $region70: #{tpu_custom_call.1} parent=43 // pred_check_branch
          %1408 = sbr.rel (%p1406) target = $region72
        $region71: #{tpu_custom_call.1} parent=43 // pred_region
          %s1409 = smul.u32 16, %s32
          %s1411 = ssub.s32 6144, 6144
          %1412 = vsyncadd %s1392, %s1411
          %s1413 = smul.addr %s1409, 3
          %s1414 = smul.addr %s1413, 128
          %s1415 = scalar_lea.hbm %s6, %s1414
          %s1416 = sshll.u32 %s1395, 4
          %s1417 = int_to_ptr.vmem [resolvable:$true] %s1416
          %1422 = dma.vmem_to_hbm [thread:$0]  %s1417, 6144, %s1415, %s1392, 384, 384, 24
        $region72: #{tpu_custom_call.1} parent=43 // pred_fallthru
          _
        // Predicated region
        $region73: #{tpu_custom_call.1} parent=43 // pred_check
          %p1423 = pneg %p207
        $region74: #{tpu_custom_call.1} parent=43 // pred_check_branch
          %1425 = sbr.rel (%p1423) target = $region76
        $region75: #{tpu_custom_call.1} parent=43 // pred_region
          %s1426 = smul.u32 16, %s32
          %s1428 = ssub.s32 2048, 2048
          %1429 = vsyncadd %s1397, %s1428
          %s1430 = smul.addr %s1426, 128
          %s1431 = scalar_lea.hbm %s7, %s1430
          %s1432 = sshll.u32 %s1400, 4
          %s1433 = int_to_ptr.vmem [resolvable:$true] %s1432
          %1438 = dma.vmem_to_hbm [thread:$0]  %s1433, 2048, %s1431, %s1397, 128, 128, 8
        $region76: #{tpu_custom_call.1} parent=43 // pred_fallthru
          _
        // Predicated region
        $region77: #{tpu_custom_call.1} parent=43 // pred_check
          %p1439 = pneg %p233
        $region78: #{tpu_custom_call.1} parent=43 // pred_check_branch
          %1441 = sbr.rel (%p1439) target = $region80
        $region79: #{tpu_custom_call.1} parent=43 // pred_region
          %s1442 = smul.u32 16, %s32
          %s1444 = ssub.s32 2048, 2048
          %1445 = vsyncadd %s1402, %s1444
          %s1446 = smul.addr %s1442, 128
          %s1447 = scalar_lea.hbm %s8, %s1446
          %s1448 = sshll.u32 %s1405, 4
          %s1449 = int_to_ptr.vmem [resolvable:$true] %s1448
          %1454 = dma.vmem_to_hbm [thread:$0]  %s1449, 2048, %s1447, %s1402, 128, 128, 8
        $region80: #{tpu_custom_call.1} parent=43 // pred_fallthru
          _
      $region44: #{tpu_custom_call.1} parent=5 // pred_fallthru
        _
      %p1455 = scmp.le.s32.totalorder 2, %s27
      // Predicated region
      $region81: #{tpu_custom_call.1} parent=5 // pred_check
        %p1456 = pneg %p1455
      $region82: #{tpu_custom_call.1} parent=5 // pred_check_branch
        %1458 = sbr.rel (%p1456) target = $region84
      $region83: #{tpu_custom_call.1} parent=5 // pred_region
        %s1459 = ssub.s32 %s27, 2
        // Predicated region
        $region85: #{tpu_custom_call.1} parent=83 // pred_check
          %p1460 = pneg %p187
        $region86: #{tpu_custom_call.1} parent=83 // pred_check_branch
          %1462 = sbr.rel (%p1460) target = $region88
        $region87: #{tpu_custom_call.1} parent=83 // pred_region
          %s1463 = sand.u32 %s172, 1
          %s1464 = scalar_lea.sflag [#allocation4], %s1463
          %s1465 = sand.u32 %s172, 1
          %s1466 = smul.addr %s1465, 384
          %s1467 = scalar_lea.vmem [#allocation13], %s1466
          %1468 = dma.done %s1464, 6144
        $region88: #{tpu_custom_call.1} parent=83 // pred_fallthru
          _
        // Predicated region
        $region89: #{tpu_custom_call.1} parent=83 // pred_check
          %p1469 = pneg %p213
        $region90: #{tpu_custom_call.1} parent=83 // pred_check_branch
          %1471 = sbr.rel (%p1469) target = $region92
        $region91: #{tpu_custom_call.1} parent=83 // pred_region
          %s1472 = sand.u32 %s33, 1
          %s1473 = scalar_lea.sflag [#allocation15], %s1472
          %s1474 = sand.u32 %s198, 1
          %s1475 = smul.addr %s1474, 128
          %s1476 = scalar_lea.vmem [#allocation14], %s1475
          %1477 = dma.done %s1473, 2048
        $region92: #{tpu_custom_call.1} parent=83 // pred_fallthru
          _
        // Predicated region
        $region93: #{tpu_custom_call.1} parent=83 // pred_check
          %p1478 = pneg %p239
        $region94: #{tpu_custom_call.1} parent=83 // pred_check_branch
          %1480 = sbr.rel (%p1478) target = $region96
        $region95: #{tpu_custom_call.1} parent=83 // pred_region
          %s1481 = sand.u32 %s33, 1
          %s1482 = scalar_lea.sflag [#allocation15], %s1481
          %s1483 = sand.u32 %s224, 1
          %s1484 = smul.addr %s1483, 128
          %s1485 = scalar_lea.vmem [#allocation16], %s1484
          %1486 = dma.done %s1482, 2048
        $region96: #{tpu_custom_call.1} parent=83 // pred_fallthru
          _
      $region84: #{tpu_custom_call.1} parent=5 // pred_fallthru
        _
    $region6: #{tpu_custom_call.1} parent=1 // loop_footer
      %s31 = sadd.s32 1, %s27
    $region7: #{tpu_custom_call.1} parent=1 // loop_footer_branch
      %26 = sbr.rel target = $region3
    $region8: #{tpu_custom_call.1} parent=1 // loop_exit
      _
    %1487 = vsyncpa [#allocation3], 1
    %s1488 = scalar_lea.sflag [#allocation3], 1
    %1489 = vsyncpa %s1488, 1
    %1490 = vsyncpa [#allocation6], 1
    %1491 = vsyncpa [#allocation9], 1
    %1492 = vsyncpa [#allocation12], 1
    %1493 = vsyncpa [#allocation4], 1
    %s1494 = scalar_lea.sflag [#allocation4], 1
    %1495 = vsyncpa %s1494, 1
    %1496 = vsyncpa [#allocation15], 1
    %s1497 = scalar_lea.sflag [#allocation15], 1
    %1498 = vsyncpa %s1497, 1

</llo_original>
